<compile_context>
chip_gen: v5e
topology: v5e:2x2
jax: 0.10.0
libtpu: 0.0.40
codegen_flags: <defaults>
</compile_context>

<pallas_src>
import functools
import math

import jax
import jax.numpy as jnp
import numpy as np
from jax.experimental import pallas as pl
from jax.experimental.pallas import tpu as pltpu


def _dlsa_kernel(q_ref, k_ref, v_ref, mask_ref,
                 wq_ref, wk_ref, wv_ref, wp_ref, bp_ref, a2_ref, b2_ref,
                 out_ref, attn_ref, acc_ref,
                 *, scale, compute_dtype, approx_softmax, ln_eps):
    """One grid step = one (batch b, head h) pair.

    q_ref:    (1, Lq, D)    query block for batch b (D on lane)
    k_ref:    (1, Lk, D)    key block for batch b
    v_ref:    (1, Lk, D)    value block for batch b
    mask_ref: (1, Lq, Lk)   inverse (padding) mask, 1.0 = masked
    wq_ref/wk_ref: (1, D, d_k)   per-head projection weights
    wv_ref:   (1, D, d_v)
    wp_ref:   (1, d_v, D)   per-head slice of W_proj^T (prepared once at setup)
    bp_ref:   (1, D)        proj bias
    a2_ref/b2_ref: (1, D)   layer-norm affine params
    out_ref:  (1, Lq, D)    final output block (resident across the head axis)
    attn_ref: (1, 1, Lq, Lk) attention weights for (h, b)
    acc_ref:  (Lq, D) f32   VMEM accumulator for the proj output across heads
    """
    h = pl.program_id(1)
    nh = pl.num_programs(1)

    @pl.when(h == 0)
    def _():
        acc_ref[...] = jnp.zeros_like(acc_ref)

    q = q_ref[0]                                   # (Lq, D) — also the residual
    k = k_ref[0]                                   # (Lk, D)
    v = v_ref[0]                                   # (Lk, D)
    cdt = compute_dtype

    # Per-head projections on the MXU; f32 accumulation regardless of compute dtype.
    q_s = jnp.dot(q.astype(cdt), wq_ref[0].astype(cdt),
                  preferred_element_type=jnp.float32)            # (Lq, d_k)
    k_s = jnp.dot(k.astype(cdt), wk_ref[0].astype(cdt),
                  preferred_element_type=jnp.float32)            # (Lk, d_k)
    v_s = jnp.dot(v.astype(cdt), wv_ref[0].astype(cdt),
                  preferred_element_type=jnp.float32)            # (Lk, d_v)

    # Scaled dot-product scores (Lq, Lk): contract on d_k, rhs transposed on the MXU.
    s = jax.lax.dot_general(q_s, k_s, (((1,), (1,)), ((), ())),
                            preferred_element_type=jnp.float32) * scale
    s = jnp.where(mask_ref[0] != 0.0, jnp.float32(-1e30), s)

    # Softmax over keys; reciprocal goes to the (otherwise idle) EUP when approx=True.
    m = jnp.max(s, axis=-1, keepdims=True)
    e = jnp.exp(s - m)
    attn = e * pl.reciprocal(jnp.sum(e, axis=-1, keepdims=True), approx=approx_softmax)
    attn_ref[0, 0] = attn.astype(attn_ref.dtype)

    head_out = jnp.dot(attn.astype(cdt), v_s.astype(cdt),
                       preferred_element_type=jnp.float32)       # (Lq, d_v)

    # proj( concat_h(head_out) ) == sum_h head_out_h @ (W_proj^T)[h]  -> accumulate per head.
    acc_ref[...] += jnp.dot(head_out.astype(cdt), wp_ref[0].astype(cdt),
                            preferred_element_type=jnp.float32)  # (Lq, D)

    @pl.when(h == nh - 1)
    def _():
        # proj bias + residual + LayerNormalization, done ONCE (hoisted out of the head loop).
        x = acc_ref[...] + bp_ref[...] + q.astype(jnp.float32)   # (Lq, D)
        d = x.shape[-1]
        mu = jnp.mean(x, axis=-1, keepdims=True)
        diff = x - mu
        var = jnp.sum(diff * diff, axis=-1, keepdims=True) / (d - 1)   # unbiased (torch.std)
        sigma = jnp.sqrt(var)
        ln = diff / (sigma + ln_eps)
        out_ref[0] = (ln * a2_ref[...] + b2_ref[...]).astype(out_ref.dtype)


def prepare_params(w_qs, w_ks, w_vs, proj_weight, proj_bias, ln_a2, ln_b2):
    """One-time parameter layout prep (constants; NOT a per-call activation transpose).

    w_qs/w_ks: (n_head, D, d_k)   w_vs: (n_head, D, d_v)   -- used as-is (already x@W layout)
    proj_weight: (D, n_head*d_v) torch Linear layout -> per-head slices of W^T: (n_head, d_v, D)
    """
    n_head, D, d_v = w_vs.shape
    w_proj_h = proj_weight.T.reshape(n_head, d_v, D)
    return dict(
        w_qs=w_qs, w_ks=w_ks, w_vs=w_vs, w_proj_h=w_proj_h,
        proj_b=proj_bias.reshape(1, D),
        ln_a2=ln_a2.reshape(1, D),
        ln_b2=ln_b2.reshape(1, D),
    )


def document_level_scaled_attention(q, k, v, params, attn_mask=None, atm=True,
                                    *, compute_dtype=None, approx_softmax=True):
    """Forward pass of DocumentLevelScaledAttention.

    q: (B, Lq, D)   k, v: (B, Lk, D)   attn_mask: (B, Lq, Lk) inverse mask (1 = pad)
    returns: (out (B, Lq, D), attns (n_head*B, Lq, Lk))

    compute_dtype: dtype of the matmul *inputs* (f32 accumulation always).  Pass
    jnp.bfloat16 on v6e/v7x to halve HBM/VMEM traffic on the dominant tensors.
    """
    B, Lq, D = q.shape
    Lk = k.shape[1]
    w_qs, w_ks, w_vs = params["w_qs"], params["w_ks"], params["w_vs"]
    n_head, _, d_k = w_qs.shape
    d_v = w_vs.shape[-1]

    if atm:
        assert attn_mask is not None, "atm=True requires attn_mask (as in the reference module)"
        mask = attn_mask.astype(jnp.float32)
    else:
        mask = jnp.zeros((B, Lq, Lk), jnp.float32)

    scale = 1.0 / math.sqrt(D)                      # ScaledDotProductAttention(d_model) temper
    cdt = compute_dtype if compute_dtype is not None else q.dtype

    kernel = functools.partial(
        _dlsa_kernel, scale=scale, compute_dtype=cdt,
        approx_softmax=approx_softmax, ln_eps=1e-3)

    grid_spec = pltpu.PrefetchScalarGridSpec(
        num_scalar_prefetch=0,
        grid=(B, n_head),                            # batch parallel, head = reduction (last)
        in_specs=[
            pl.BlockSpec((1, Lq, D), lambda b, h: (b, 0, 0)),        # q (native layout)
            pl.BlockSpec((1, Lk, D), lambda b, h: (b, 0, 0)),        # k
            pl.BlockSpec((1, Lk, D), lambda b, h: (b, 0, 0)),        # v
            pl.BlockSpec((1, Lq, Lk), lambda b, h: (b, 0, 0)),       # mask
            pl.BlockSpec((1, D, d_k), lambda b, h: (h, 0, 0)),       # w_qs[h]
            pl.BlockSpec((1, D, d_k), lambda b, h: (h, 0, 0)),       # w_ks[h]
            pl.BlockSpec((1, D, d_v), lambda b, h: (h, 0, 0)),       # w_vs[h]
            pl.BlockSpec((1, d_v, D), lambda b, h: (h, 0, 0)),       # (W_proj^T)[h]
            pl.BlockSpec((1, D), lambda b, h: (0, 0)),               # proj bias
            pl.BlockSpec((1, D), lambda b, h: (0, 0)),               # ln a_2
            pl.BlockSpec((1, D), lambda b, h: (0, 0)),               # ln b_2
        ],
        out_specs=(
            pl.BlockSpec((1, Lq, D), lambda b, h: (b, 0, 0)),        # resident across h
            pl.BlockSpec((1, 1, Lq, Lk), lambda b, h: (h, b, 0, 0)),
        ),
        scratch_shapes=[pltpu.VMEM((Lq, D), jnp.float32)],           # proj accumulator
    )

    out, attns4 = pl.pallas_call(
        kernel,
        out_shape=(
            jax.ShapeDtypeStruct((B, Lq, D), q.dtype),
            jax.ShapeDtypeStruct((n_head, B, Lq, Lk), jnp.float32),
        ),
        grid_spec=grid_spec,
        compiler_params=pltpu.CompilerParams(
            dimension_semantics=("parallel", "arbitrary"),
            vmem_limit_bytes=32 * 1024 * 1024,
        ),
    )(q, k, v, mask, w_qs, w_ks, w_vs,
      params["w_proj_h"], params["proj_b"], params["ln_a2"], params["ln_b2"])

    # Head-major (n_head, B, ...) -> (n_head*B, ...) is a contiguous (free) reshape,
    # matching the module's attns layout exactly.
    attns = attns4.reshape(n_head * B, Lq, Lk)
    return out, attns


def _reference(q, k, v, attn_mask, w_qs, w_ks, w_vs, proj_w, proj_b, ln_a2, ln_b2):
    """Pure-JAX mirror of the PyTorch forward (eval mode)."""
    n_head, D, d_k = w_qs.shape
    d_v = w_vs.shape[-1]
    B, Lq, _ = q.shape
    Lk = k.shape[1]
    hp = jax.lax.Precision.HIGHEST

    q_s = jnp.einsum("bld,hdk->hblk", q, w_qs, precision=hp).reshape(n_head * B, Lq, d_k)
    k_s = jnp.einsum("bld,hdk->hblk", k, w_ks, precision=hp).reshape(n_head * B, Lk, d_k)
    v_s = jnp.einsum("bld,hdk->hblk", v, w_vs, precision=hp).reshape(n_head * B, Lk, d_v)

    scores = jnp.einsum("nqd,nkd->nqk", q_s, k_s, precision=hp) / math.sqrt(D)
    mask_rep = jnp.tile(attn_mask, (n_head, 1, 1))
    scores = jnp.where(mask_rep != 0, jnp.float32(-1e30), scores)
    attns = jax.nn.softmax(scores, axis=-1)
    outputs = jnp.einsum("nqk,nkv->nqv", attns, v_s, precision=hp)     # (n_head*B, Lq, d_v)

    # torch.cat(torch.split(outputs, B, dim=0), dim=-1)
    cat = jnp.concatenate([outputs[i * B:(i + 1) * B] for i in range(n_head)], axis=-1)
    proj = jnp.einsum("blv,dv->bld", cat, proj_w, precision=hp) + proj_b

    x = proj + q
    mu = jnp.mean(x, axis=-1, keepdims=True)
    sigma = jnp.std(x, axis=-1, keepdims=True, ddof=1)
    ln = (x - mu) / (sigma + 1e-3) * ln_a2 + ln_b2
    return ln, attns


if __name__ == "__main__":
    # Small but (8,128)-tile-aligned shapes (per perf feedback): full vreg / MXU occupancy.
    n_head = 2
    d_model_ctor = 64          # constructor arg; bidirectional=True doubles it
    D = d_model_ctor * 2       # 128  (lane-dim aligned)
    d_k = d_v = 128
    B, Lq, Lk = 2, 8, 16

    key = jax.random.PRNGKey(0)
    ks = jax.random.split(key, 11)

    q = jax.random.normal(ks[0], (B, Lq, D), jnp.float32)
    k = jax.random.normal(ks[1], (B, Lk, D), jnp.float32)
    v = jax.random.normal(ks[2], (B, Lk, D), jnp.float32)

    # xavier_normal-style init for the per-head projection tensors
    std_qk = math.sqrt(2.0 / (D + d_k))
    std_v = math.sqrt(2.0 / (D + d_v))
    w_qs = jax.random.normal(ks[3], (n_head, D, d_k), jnp.float32) * std_qk
    w_ks = jax.random.normal(ks[4], (n_head, D, d_k), jnp.float32) * std_qk
    w_vs = jax.random.normal(ks[5], (n_head, D, d_v), jnp.float32) * std_v

    bound = 1.0 / math.sqrt(n_head * d_v)
    proj_w = jax.random.uniform(ks[6], (D, n_head * d_v), jnp.float32, -bound, bound)
    proj_b = jax.random.uniform(ks[7], (D,), jnp.float32, -bound, bound)
    ln_a2 = 1.0 + 0.1 * jax.random.normal(ks[8], (D,), jnp.float32)
    ln_b2 = 0.1 * jax.random.normal(ks[9], (D,), jnp.float32)

    # Inverse padding mask from encoder lengths (1 = padded key position).
    encoder_lens = jnp.array([Lk, 11], dtype=jnp.int32)
    key_pad = (jnp.arange(Lk)[None, :] >= encoder_lens[:, None])          # (B, Lk)
    attn_mask = jnp.broadcast_to(key_pad[:, None, :], (B, Lq, Lk)).astype(jnp.float32)

    params = prepare_params(w_qs, w_ks, w_vs, proj_w, proj_b, ln_a2, ln_b2)

    ref_out, ref_attns = _reference(q, k, v, attn_mask,
                                    w_qs, w_ks, w_vs, proj_w, proj_b, ln_a2, ln_b2)

    # 1) Exact-math path (approx_softmax=False): tight tolerance.
    out, attns = document_level_scaled_attention(
        q, k, v, params, attn_mask=attn_mask, atm=True, approx_softmax=False)
    out, attns = jax.block_until_ready((out, attns))
    np.testing.assert_allclose(np.asarray(out), np.asarray(ref_out), rtol=1e-4, atol=1e-4)
    np.testing.assert_allclose(np.asarray(attns), np.asarray(ref_attns), rtol=1e-4, atol=1e-4)

    # 2) Production path: EUP approximate reciprocal in the softmax (~1e-3 relative).
    out2, attns2 = jax.block_until_ready(document_level_scaled_attention(
        q, k, v, params, attn_mask=attn_mask, atm=True, approx_softmax=True))
    np.testing.assert_allclose(np.asarray(out2), np.asarray(ref_out), rtol=1e-2, atol=1e-2)
    np.testing.assert_allclose(np.asarray(attns2), np.asarray(ref_attns), rtol=1e-2, atol=1e-2)

    assert out.shape == (B, Lq, D)
    assert attns.shape == (n_head * B, Lq, Lk)

    print("KERNEL_OK")
</pallas_src>

<mosaic_0001>
module attributes {stable_mosaic.version = 11 : i64} {
  func.func @_dlsa_kernel(%arg0: i32, %arg1: i32, %arg2: memref<1x8x128xf32, #tpu.memory_space<vmem>>, %arg3: memref<1x16x128xf32, #tpu.memory_space<vmem>>, %arg4: memref<1x16x128xf32, #tpu.memory_space<vmem>>, %arg5: memref<1x8x16xf32, #tpu.memory_space<vmem>>, %arg6: memref<1x128x128xf32, #tpu.memory_space<vmem>>, %arg7: memref<1x128x128xf32, #tpu.memory_space<vmem>>, %arg8: memref<1x128x128xf32, #tpu.memory_space<vmem>>, %arg9: memref<1x128x128xf32, #tpu.memory_space<vmem>>, %arg10: memref<1x128xf32, #tpu.memory_space<vmem>>, %arg11: memref<1x128xf32, #tpu.memory_space<vmem>>, %arg12: memref<1x128xf32, #tpu.memory_space<vmem>>, %arg13: memref<1x8x128xf32, #tpu.memory_space<vmem>>, %arg14: memref<1x1x8x16xf32, #tpu.memory_space<vmem>>, %arg15: memref<8x128xf32, #tpu.memory_space<vmem>>) attributes {dimension_semantics = [#tpu.dimension_semantics<parallel>, #tpu.dimension_semantics<arbitrary>], iteration_bounds = array<i64: 2, 2>, scalar_prefetch = 0 : i64, scratch_operands = 1 : i64, tpu.core_type = #tpu.core_type<tc>, window_params = [{transform_indices = @transform_0, window_bounds = array<i64: 1, 8, 128>}, {transform_indices = @transform_1, window_bounds = array<i64: 1, 16, 128>}, {transform_indices = @transform_2, window_bounds = array<i64: 1, 16, 128>}, {transform_indices = @transform_3, window_bounds = array<i64: 1, 8, 16>}, {transform_indices = @transform_4, window_bounds = array<i64: 1, 128, 128>}, {transform_indices = @transform_5, window_bounds = array<i64: 1, 128, 128>}, {transform_indices = @transform_6, window_bounds = array<i64: 1, 128, 128>}, {transform_indices = @transform_7, window_bounds = array<i64: 1, 128, 128>}, {pipeline_mode = #tpu.pipeline_mode<synchronous>, transform_indices = @transform_8, window_bounds = array<i64: 1, 128>}, {pipeline_mode = #tpu.pipeline_mode<synchronous>, transform_indices = @transform_9, window_bounds = array<i64: 1, 128>}, {pipeline_mode = #tpu.pipeline_mode<synchronous>, transform_indices = @transform_10, window_bounds = array<i64: 1, 128>}, {transform_indices = @transform_11, window_bounds = array<i64: 1, 8, 128>}, {transform_indices = @transform_12, window_bounds = array<i64: 1, 1, 8, 16>}]} {
    %c0_i32 = arith.constant 0 : i32
    %0 = arith.cmpi eq, %arg1, %c0_i32 : i32
    %1 = arith.extui %0 : i1 to i32
    %c0_i32_0 = arith.constant 0 : i32
    %2 = arith.cmpi ne, %1, %c0_i32_0 : i32
    scf.if %2 {
      %cst_43 = arith.constant 0.000000e+00 : f32
      %50 = vector.broadcast %cst_43 : f32 to vector<8x128xf32>
      %c0_44 = arith.constant 0 : index
      %c0_45 = arith.constant 0 : index
      %51 = vector.load %arg15[%c0_44, %c0_45] : memref<8x128xf32, #tpu.memory_space<vmem>>, vector<8x128xf32>
      tpu.vector_store %arg15[%c0_44, %c0_45], %50 {strides = array<i32>} : memref<8x128xf32, #tpu.memory_space<vmem>>, vector<8x128xf32>,
    } else {
    }
    %c0 = arith.constant 0 : index
    %c0_1 = arith.constant 0 : index
    %c0_2 = arith.constant 0 : index
    %3 = vector.load %arg2[%c0, %c0_1, %c0_2] : memref<1x8x128xf32, #tpu.memory_space<vmem>>, vector<1x8x128xf32>
    %4 = vector.shape_cast %3 : vector<1x8x128xf32> to vector<8x128xf32>
    %c0_3 = arith.constant 0 : index
    %c0_4 = arith.constant 0 : index
    %c0_5 = arith.constant 0 : index
    %5 = vector.load %arg3[%c0_3, %c0_4, %c0_5] : memref<1x16x128xf32, #tpu.memory_space<vmem>>, vector<1x16x128xf32>
    %6 = vector.shape_cast %5 : vector<1x16x128xf32> to vector<16x128xf32>
    %c0_6 = arith.constant 0 : index
    %c0_7 = arith.constant 0 : index
    %c0_8 = arith.constant 0 : index
    %7 = vector.load %arg4[%c0_6, %c0_7, %c0_8] : memref<1x16x128xf32, #tpu.memory_space<vmem>>, vector<1x16x128xf32>
    %8 = vector.shape_cast %7 : vector<1x16x128xf32> to vector<16x128xf32>
    %c0_9 = arith.constant 0 : index
    %c0_10 = arith.constant 0 : index
    %c0_11 = arith.constant 0 : index
    %9 = vector.load %arg6[%c0_9, %c0_10, %c0_11] : memref<1x128x128xf32, #tpu.memory_space<vmem>>, vector<1x128x128xf32>
    %10 = vector.shape_cast %9 : vector<1x128x128xf32> to vector<128x128xf32>
    %cst = arith.constant dense<0.000000e+00> : vector<8x128xf32>
    %11 = tpu.matmul %4, %10, %cst {dimension_numbers = #tpu.dot_dimension_numbers<[1], [0], [0], [1], [0, 0, 1, 1], [], []>} : vector<8x128xf32>, vector<128x128xf32>, vector<8x128xf32> -> vector<8x128xf32>
    %c0_12 = arith.constant 0 : index
    %c0_13 = arith.constant 0 : index
    %c0_14 = arith.constant 0 : index
    %12 = vector.load %arg7[%c0_12, %c0_13, %c0_14] : memref<1x128x128xf32, #tpu.memory_space<vmem>>, vector<1x128x128xf32>
    %13 = vector.shape_cast %12 : vector<1x128x128xf32> to vector<128x128xf32>
    %cst_15 = arith.constant dense<0.000000e+00> : vector<16x128xf32>
    %14 = tpu.matmul %6, %13, %cst_15 {dimension_numbers = #tpu.dot_dimension_numbers<[1], [0], [0], [1], [0, 0, 1, 1], [], []>} : vector<16x128xf32>, vector<128x128xf32>, vector<16x128xf32> -> vector<16x128xf32>
    %c0_16 = arith.constant 0 : index
    %c0_17 = arith.constant 0 : index
    %c0_18 = arith.constant 0 : index
    %15 = vector.load %arg8[%c0_16, %c0_17, %c0_18] : memref<1x128x128xf32, #tpu.memory_space<vmem>>, vector<1x128x128xf32>
    %16 = vector.shape_cast %15 : vector<1x128x128xf32> to vector<128x128xf32>
    %cst_19 = arith.constant dense<0.000000e+00> : vector<16x128xf32>
    %17 = tpu.matmul %8, %16, %cst_19 {dimension_numbers = #tpu.dot_dimension_numbers<[1], [0], [0], [1], [0, 0, 1, 1], [], []>} : vector<16x128xf32>, vector<128x128xf32>, vector<16x128xf32> -> vector<16x128xf32>
    %cst_20 = arith.constant dense<0.000000e+00> : vector<8x16xf32>
    %18 = tpu.matmul %11, %14, %cst_20 {dimension_numbers = #tpu.dot_dimension_numbers<[1], [1], [0], [0], [0, 0, 1, 0], [], []>} : vector<8x128xf32>, vector<16x128xf32>, vector<8x16xf32> -> vector<8x16xf32>
    %cst_21 = arith.constant 0.0883883461 : f32
    %19 = vector.broadcast %cst_21 : f32 to vector<8x16xf32>
    %20 = arith.mulf %18, %19 : vector<8x16xf32>
    %c0_22 = arith.constant 0 : index
    %c0_23 = arith.constant 0 : index
    %c0_24 = arith.constant 0 : index
    %21 = vector.load %arg5[%c0_22, %c0_23, %c0_24] : memref<1x8x16xf32, #tpu.memory_space<vmem>>, vector<1x8x16xf32>
    %22 = vector.shape_cast %21 : vector<1x8x16xf32> to vector<8x16xf32>
    %cst_25 = arith.constant 0.000000e+00 : f32
    %23 = vector.broadcast %cst_25 : f32 to vector<8x16xf32>
    %24 = arith.cmpf one, %22, %23 : vector<8x16xf32>
    %cst_26 = arith.constant -1.000000e+30 : f32
    %25 = vector.broadcast %cst_26 : f32 to vector<8x16xf32>
    %26 = arith.select %24, %25, %20 : vector<8x16xi1>, vector<8x16xf32>
    %cst_27 = arith.constant dense<0xFF800000> : vector<8xf32>
    %27 = vector.multi_reduction <maximumf>, %26, %cst_27 [1] : vector<8x16xf32> to vector<8xf32>
    %28 = vector.shape_cast %27 : vector<8xf32> to vector<8x1xf32>
    %29 = vector.broadcast %28 : vector<8x1xf32> to vector<8x16xf32>
    %30 = arith.subf %26, %29 : vector<8x16xf32>
    %31 = math.exp %30 : vector<8x16xf32>
    %cst_28 = arith.constant dense<0.000000e+00> : vector<8xf32>
    %32 = vector.multi_reduction <add>, %31, %cst_28 [1] : vector<8x16xf32> to vector<8xf32>
    %33 = vector.shape_cast %32 : vector<8xf32> to vector<8x1xf32>
    %34 = tpu.reciprocal %33 : vector<8x1xf32> -> vector<8x1xf32>
    %35 = vector.broadcast %34 : vector<8x1xf32> to vector<8x16xf32>
    %36 = arith.mulf %31, %35 : vector<8x16xf32>
    %c0_29 = arith.constant 0 : index
    %c0_30 = arith.constant 0 : index
    %c0_31 = arith.constant 0 : index
    %c0_32 = arith.constant 0 : index
    %37 = vector.load %arg14[%c0_29, %c0_30, %c0_31, %c0_32] : memref<1x1x8x16xf32, #tpu.memory_space<vmem>>, vector<1x1x8x16xf32>
    %38 = vector.shape_cast %37 : vector<1x1x8x16xf32> to vector<8x16xf32>
    %39 = vector.shape_cast %36 : vector<8x16xf32> to vector<1x1x8x16xf32>
    tpu.vector_store %arg14[%c0_29, %c0_30, %c0_31, %c0_32], %39 {strides = array<i32>} : memref<1x1x8x16xf32, #tpu.memory_space<vmem>>, vector<1x1x8x16xf32>,
    %cst_33 = arith.constant dense<0.000000e+00> : vector<8x128xf32>
    %40 = tpu.matmul %36, %17, %cst_33 {dimension_numbers = #tpu.dot_dimension_numbers<[1], [0], [0], [1], [0, 0, 1, 1], [], []>} : vector<8x16xf32>, vector<16x128xf32>, vector<8x128xf32> -> vector<8x128xf32>
    %c0_34 = arith.constant 0 : index
    %c0_35 = arith.constant 0 : index
    %41 = vector.load %arg15[%c0_34, %c0_35] : memref<8x128xf32, #tpu.memory_space<vmem>>, vector<8x128xf32>
    %c0_36 = arith.constant 0 : index
    %c0_37 = arith.constant 0 : index
    %c0_38 = arith.constant 0 : index
    %42 = vector.load %arg9[%c0_36, %c0_37, %c0_38] : memref<1x128x128xf32, #tpu.memory_space<vmem>>, vector<1x128x128xf32>
    %43 = vector.shape_cast %42 : vector<1x128x128xf32> to vector<128x128xf32>
    %cst_39 = arith.constant dense<0.000000e+00> : vector<8x128xf32>
    %44 = tpu.matmul %40, %43, %cst_39 {dimension_numbers = #tpu.dot_dimension_numbers<[1], [0], [0], [1], [0, 0, 1, 1], [], []>} : vector<8x128xf32>, vector<128x128xf32>, vector<8x128xf32> -> vector<8x128xf32>
    %45 = arith.addf %41, %44 : vector<8x128xf32>
    %c0_40 = arith.constant 0 : index
    %c0_41 = arith.constant 0 : index
    %46 = vector.load %arg15[%c0_40, %c0_41] : memref<8x128xf32, #tpu.memory_space<vmem>>, vector<8x128xf32>
    tpu.vector_store %arg15[%c0_40, %c0_41], %45 {strides = array<i32>} : memref<8x128xf32, #tpu.memory_space<vmem>>, vector<8x128xf32>,
    %c1_i32 = arith.constant 1 : i32
    %47 = arith.cmpi eq, %arg1, %c1_i32 : i32
    %48 = arith.extui %47 : i1 to i32
    %c0_i32_42 = arith.constant 0 : i32
    %49 = arith.cmpi ne, %48, %c0_i32_42 : i32
    scf.if %49 {
      %c0_43 = arith.constant 0 : index
      %c0_44 = arith.constant 0 : index
      %50 = vector.load %arg15[%c0_43, %c0_44] : memref<8x128xf32, #tpu.memory_space<vmem>>, vector<8x128xf32>
      %c0_45 = arith.constant 0 : index
      %c0_46 = arith.constant 0 : index
      %51 = vector.load %arg10[%c0_45, %c0_46] : memref<1x128xf32, #tpu.memory_space<vmem>>, vector<1x128xf32>
      %52 = vector.broadcast %51 : vector<1x128xf32> to vector<8x128xf32>
      %53 = arith.addf %50, %52 : vector<8x128xf32>
      %54 = arith.addf %53, %4 : vector<8x128xf32>
      %cst_47 = arith.constant dense<0.000000e+00> : vector<8xf32>
      %55 = vector.multi_reduction <add>, %54, %cst_47 [1] : vector<8x128xf32> to vector<8xf32>
      %56 = vector.shape_cast %55 : vector<8xf32> to vector<8x1xf32>
      %cst_48 = arith.constant 1.280000e+02 : f32
      %57 = vector.broadcast %cst_48 : f32 to vector<8x1xf32>
      %58 = arith.divf %56, %57 : vector<8x1xf32>
      %59 = vector.broadcast %58 : vector<8x1xf32> to vector<8x128xf32>
      %60 = arith.subf %54, %59 : vector<8x128xf32>
      %61 = arith.mulf %60, %60 : vector<8x128xf32>
      %cst_49 = arith.constant dense<0.000000e+00> : vector<8xf32>
      %62 = vector.multi_reduction <add>, %61, %cst_49 [1] : vector<8x128xf32> to vector<8xf32>
      %63 = vector.shape_cast %62 : vector<8xf32> to vector<8x1xf32>
      %cst_50 = arith.constant 1.270000e+02 : f32
      %64 = vector.broadcast %cst_50 : f32 to vector<8x1xf32>
      %65 = arith.divf %63, %64 : vector<8x1xf32>
      %66 = math.sqrt %65 : vector<8x1xf32>
      %cst_51 = arith.constant 1.000000e-03 : f32
      %67 = vector.broadcast %cst_51 : f32 to vector<8x1xf32>
      %68 = arith.addf %66, %67 : vector<8x1xf32>
      %69 = vector.broadcast %68 : vector<8x1xf32> to vector<8x128xf32>
      %70 = arith.divf %60, %69 : vector<8x128xf32>
      %c0_52 = arith.constant 0 : index
      %c0_53 = arith.constant 0 : index
      %71 = vector.load %arg11[%c0_52, %c0_53] : memref<1x128xf32, #tpu.memory_space<vmem>>, vector<1x128xf32>
      %72 = vector.broadcast %71 : vector<1x128xf32> to vector<8x128xf32>
      %73 = arith.mulf %70, %72 : vector<8x128xf32>
      %c0_54 = arith.constant 0 : index
      %c0_55 = arith.constant 0 : index
      %74 = vector.load %arg12[%c0_54, %c0_55] : memref<1x128xf32, #tpu.memory_space<vmem>>, vector<1x128xf32>
      %75 = vector.broadcast %74 : vector<1x128xf32> to vector<8x128xf32>
      %76 = arith.addf %73, %75 : vector<8x128xf32>
      %c0_56 = arith.constant 0 : index
      %c0_57 = arith.constant 0 : index
      %c0_58 = arith.constant 0 : index
      %77 = vector.load %arg13[%c0_56, %c0_57, %c0_58] : memref<1x8x128xf32, #tpu.memory_space<vmem>>, vector<1x8x128xf32>
      %78 = vector.shape_cast %77 : vector<1x8x128xf32> to vector<8x128xf32>
      %79 = vector.shape_cast %76 : vector<8x128xf32> to vector<1x8x128xf32>
      tpu.vector_store %arg13[%c0_56, %c0_57, %c0_58], %79 {strides = array<i32>} : memref<1x8x128xf32, #tpu.memory_space<vmem>>, vector<1x8x128xf32>,
    } else {
    }
    return
  }
  func.func @transform_0(%arg0: i32, %arg1: i32) -> (i32, i32, i32) {
    %c0_i32 = arith.constant 0 : i32
    %c0_i32_0 = arith.constant 0 : i32
    %c0_i32_1 = arith.constant 0 : i32
    return %arg0, %c0_i32, %c0_i32_0 : i32, i32, i32
  }
  func.func @transform_1(%arg0: i32, %arg1: i32) -> (i32, i32, i32) {
    %c0_i32 = arith.constant 0 : i32
    %c0_i32_0 = arith.constant 0 : i32
    %c0_i32_1 = arith.constant 0 : i32
    return %arg0, %c0_i32, %c0_i32_0 : i32, i32, i32
  }
  func.func @transform_2(%arg0: i32, %arg1: i32) -> (i32, i32, i32) {
    %c0_i32 = arith.constant 0 : i32
    %c0_i32_0 = arith.constant 0 : i32
    %c0_i32_1 = arith.constant 0 : i32
    return %arg0, %c0_i32, %c0_i32_0 : i32, i32, i32
  }
  func.func @transform_3(%arg0: i32, %arg1: i32) -> (i32, i32, i32) {
    %c0_i32 = arith.constant 0 : i32
    %c0_i32_0 = arith.constant 0 : i32
    %c0_i32_1 = arith.constant 0 : i32
    return %arg0, %c0_i32, %c0_i32_0 : i32, i32, i32
  }
  func.func @transform_4(%arg0: i32, %arg1: i32) -> (i32, i32, i32) {
    %c0_i32 = arith.constant 0 : i32
    %c0_i32_0 = arith.constant 0 : i32
    %c0_i32_1 = arith.constant 0 : i32
    return %arg1, %c0_i32, %c0_i32_0 : i32, i32, i32
  }
  func.func @transform_5(%arg0: i32, %arg1: i32) -> (i32, i32, i32) {
    %c0_i32 = arith.constant 0 : i32
    %c0_i32_0 = arith.constant 0 : i32
    %c0_i32_1 = arith.constant 0 : i32
    return %arg1, %c0_i32, %c0_i32_0 : i32, i32, i32
  }
  func.func @transform_6(%arg0: i32, %arg1: i32) -> (i32, i32, i32) {
    %c0_i32 = arith.constant 0 : i32
    %c0_i32_0 = arith.constant 0 : i32
    %c0_i32_1 = arith.constant 0 : i32
    return %arg1, %c0_i32, %c0_i32_0 : i32, i32, i32
  }
  func.func @transform_7(%arg0: i32, %arg1: i32) -> (i32, i32, i32) {
    %c0_i32 = arith.constant 0 : i32
    %c0_i32_0 = arith.constant 0 : i32
    %c0_i32_1 = arith.constant 0 : i32
    return %arg1, %c0_i32, %c0_i32_0 : i32, i32, i32
  }
  func.func @transform_8(%arg0: i32, %arg1: i32) -> (i32, i32) {
    %c0_i32 = arith.constant 0 : i32
    %c0_i32_0 = arith.constant 0 : i32
    %c0_i32_1 = arith.constant 0 : i32
    return %c0_i32, %c0_i32_0 : i32, i32
  }
  func.func @transform_9(%arg0: i32, %arg1: i32) -> (i32, i32) {
    %c0_i32 = arith.constant 0 : i32
    %c0_i32_0 = arith.constant 0 : i32
    %c0_i32_1 = arith.constant 0 : i32
    return %c0_i32, %c0_i32_0 : i32, i32
  }
  func.func @transform_10(%arg0: i32, %arg1: i32) -> (i32, i32) {
    %c0_i32 = arith.constant 0 : i32
    %c0_i32_0 = arith.constant 0 : i32
    %c0_i32_1 = arith.constant 0 : i32
    return %c0_i32, %c0_i32_0 : i32, i32
  }
  func.func @transform_11(%arg0: i32, %arg1: i32) -> (i32, i32, i32) {
    %c0_i32 = arith.constant 0 : i32
    %c0_i32_0 = arith.constant 0 : i32
    %c0_i32_1 = arith.constant 0 : i32
    return %arg0, %c0_i32, %c0_i32_0 : i32, i32, i32
  }
  func.func @transform_12(%arg0: i32, %arg1: i32) -> (i32, i32, i32, i32) {
    %c0_i32 = arith.constant 0 : i32
    %c0_i32_0 = arith.constant 0 : i32
    %c0_i32_1 = arith.constant 0 : i32
    return %arg1, %arg0, %c0_i32, %c0_i32_0 : i32, i32, i32, i32
  }
}

</mosaic_0001>

<llo_original>
// kernel: tpu_custom_call.1
$region0: #{tpu_custom_call.1}
  #allocation0 [shape = 'u32[]', space=smem, size = 0x4, offset = 0x4, fixed_abs, tag = 'smem constant byte address 0x4 - core index']
  #allocation1 [shape = 'u32[72,128]{1,0:T(1,128)}', space=vmem, size = 0x9000, scoped, tag = 'internal scratch']
  #allocation2 [shape = 'f32[8,128]{1,0:T(8,128)}', space=vmem, size = 0x1000, scoped, tag = 'scratch operand']
  %s0 = inlined_call_operand.hbm [shape: f32[2,8,128], index: 0, kind: input, shape index: {}]
  %s1 = inlined_call_operand.hbm [shape: f32[2,16,128], index: 1, kind: input, shape index: {}]
  %s2 = inlined_call_operand.hbm [shape: f32[2,16,128], index: 2, kind: input, shape index: {}]
  %s3 = inlined_call_operand.hbm [shape: f32[2,8,16], index: 3, kind: input, shape index: {}]
  %s4 = inlined_call_operand.hbm [shape: f32[2,128,128], index: 4, kind: input, shape index: {}]
  %s5 = inlined_call_operand.hbm [shape: f32[2,128,128], index: 5, kind: input, shape index: {}]
  %s6 = inlined_call_operand.hbm [shape: f32[2,128,128], index: 6, kind: input, shape index: {}]
  %s7 = inlined_call_operand.hbm [shape: f32[2,128,128], index: 7, kind: input, shape index: {}]
  %s8 = inlined_call_operand.vmem [shape: f32[1,128], index: 8, kind: input, shape index: {}]
  %s9 = inlined_call_operand.vmem [shape: f32[1,128], index: 9, kind: input, shape index: {}]
  %s10 = inlined_call_operand.vmem [shape: f32[1,128], index: 10, kind: input, shape index: {}]
  %s11 = inlined_call_operand.hbm [shape: f32[2,8,128], index: 11, kind: output, shape index: {0}]
  %s12 = inlined_call_operand.hbm [shape: f32[2,2,8,16], index: 12, kind: output, shape index: {1}]
  %13 = xla_tuple %s11, %s12
  %s14 = sld [smem:[#allocation0]]
  $region125: #{tpu_custom_call.1} parent=0
    _
  %s16 = ssub.s32 1, %s14
  %s17 = scalar_select 0, %s16, %s14
  $region1: #{tpu_custom_call.1} parent=0
    #allocation3 [shape = 'u8[8192]{0}', space=vmem, size = 0x2000, scoped, tag = 'input window, operand 0']
    #allocation4 [shape = 's32[2]{0}', space=sflag, size = 0x8, scoped, tag = 'scoped memory for tpu_custom_call.1']
    #allocation5 [shape = 's32[2]{0}', space=sflag, size = 0x8, scoped, tag = 'scoped memory for tpu_custom_call.1']
    #allocation6 [shape = 'u8[16384]{0}', space=vmem, size = 0x4000, scoped, tag = 'input window, operand 1']
    #allocation7 [shape = 's32[2]{0}', space=sflag, size = 0x8, scoped, tag = 'scoped memory for tpu_custom_call.1']
    #allocation8 [shape = 'u8[16384]{0}', space=vmem, size = 0x4000, scoped, tag = 'input window, operand 2']
    #allocation9 [shape = 'u8[8192]{0}', space=vmem, size = 0x2000, scoped, tag = 'input window, operand 3']
    #allocation10 [shape = 's32[2]{0}', space=sflag, size = 0x8, scoped, tag = 'scoped memory for tpu_custom_call.1']
    #allocation11 [shape = 'u8[131072]{0}', space=vmem, size = 0x20000, scoped, tag = 'input window, operand 4']
    #allocation12 [shape = 'u8[131072]{0}', space=vmem, size = 0x20000, scoped, tag = 'input window, operand 5']
    #allocation13 [shape = 's32[2]{0}', space=sflag, size = 0x8, scoped, tag = 'scoped memory for tpu_custom_call.1']
    #allocation14 [shape = 'u8[131072]{0}', space=vmem, size = 0x20000, scoped, tag = 'input window, operand 6']
    #allocation15 [shape = 'u8[131072]{0}', space=vmem, size = 0x20000, scoped, tag = 'input window, operand 7']
    #allocation16 [shape = 's32[2]{0}', space=sflag, size = 0x8, scoped, tag = 'scoped memory for tpu_custom_call.1']
    #allocation17 [shape = 'u8[8192]{0}', space=vmem, size = 0x2000, scoped, tag = 'output window, operand 0']
    #allocation18 [shape = 'u8[8192]{0}', space=vmem, size = 0x2000, scoped, tag = 'output window, operand 1']
    #allocation19 [shape = 's32[2]{0}', space=sflag, size = 0x8, scoped, tag = 'scoped memory for tpu_custom_call.1']
    %18 = vsyncpa [#allocation4], 0
    %s19 = scalar_lea.sflag [#allocation4], 1
    %20 = vsyncpa %s19, 0
    %21 = vsyncpa [#allocation7], 0
    %s22 = scalar_lea.sflag [#allocation7], 1
    %23 = vsyncpa %s22, 0
    %24 = vsyncpa [#allocation10], 0
    %s25 = scalar_lea.sflag [#allocation10], 1
    %26 = vsyncpa %s25, 0
    %27 = vsyncpa [#allocation13], 0
    %s28 = scalar_lea.sflag [#allocation13], 1
    %29 = vsyncpa %s28, 0
    %30 = vsyncpa [#allocation16], 0
    %s31 = scalar_lea.sflag [#allocation16], 1
    %32 = vsyncpa %s31, 0
    %33 = vsyncpa [#allocation5], 0
    %s34 = scalar_lea.sflag [#allocation5], 1
    %35 = vsyncpa %s34, 0
    %36 = vsyncpa [#allocation19], 0
    %s37 = scalar_lea.sflag [#allocation19], 1
    %38 = vsyncpa %s37, 0
    loop: start=0, step=1, limit=6
    $region2: #{tpu_custom_call.1} parent=1 // loop_pre_header
      _
    $region3: #{tpu_custom_call.1} parent=1 // loop_header
      %s40 = sphi 0, %s44
      %p41 = scmp.ge.s32.totalorder %s40, 6
      %s47 = sphi 0, %s59
      %s48 = sphi 0, %s55
      %s49 = sphi 0, %s47
      %s50 = sphi 0, %s48
      %s51 = sphi 0, %s49
      %s52 = sphi 0, %s50
      %s62 = sphi 0, %s64
      %s65 = sphi 0, %s62
      %s66 = sphi 0, %s65
      %s82 = sphi 0, %s66
      %s88 = sphi 0, %s90
      %s91 = sphi 0, %s88
      %s92 = sphi 0, %s91
      %s108 = sphi 0, %s92
      %s114 = sphi 0, %s116
      %s117 = sphi 0, %s114
      %s118 = sphi 0, %s117
      %s134 = sphi 0, %s118
      %s140 = sphi 0, %s142
      %s143 = sphi 0, %s140
      %s144 = sphi 0, %s143
      %s160 = sphi 0, %s144
      %s166 = sphi 0, %s168
      %s169 = sphi 0, %s166
      %s170 = sphi 0, %s169
      %s186 = sphi 0, %s170
      %s192 = sphi 0, %s194
      %s195 = sphi 0, %s192
      %s196 = sphi 0, %s195
      %s212 = sphi 0, %s196
      %s218 = sphi 0, %s220
      %s221 = sphi 0, %s218
      %s222 = sphi 0, %s221
      %s238 = sphi 0, %s222
      %s244 = sphi 0, %s246
      %s247 = sphi 0, %s244
      %s248 = sphi 0, %s247
      %s264 = sphi 0, %s248
      %s268 = sphi 0, %s268
      %s270 = sphi 0, %s268
      %s271 = sphi 0, %s270
      %s285 = sphi 0, %s271
      %s289 = sphi 0, %s289
      %s291 = sphi 0, %s289
      %s292 = sphi 0, %s291
      %s306 = sphi 0, %s292
      %s310 = sphi 0, %s310
      %s312 = sphi 0, %s310
      %s313 = sphi 0, %s312
      %s327 = sphi 0, %s313
      %s333 = sphi 0, %s335
      %s336 = sphi 0, %s333
      %s337 = sphi 0, %s336
      %s353 = sphi 0, %s337
      %s361 = sphi 0, %s363
      %s364 = sphi 0, %s361
      %s365 = sphi 0, %s364
      %s381 = sphi 0, %s365
    $region4: #{tpu_custom_call.1} parent=1 // loop_header_branch
      %43 = sbr.rel (%p41) target = $region8
    $region5: #{tpu_custom_call.1} parent=1 // loop_body
      %s45 = ssub.s32 %s40, 1
      %s46 = ssub.s32 %s40, 2
      %s53 = sadd.s32 1, %s48
      %p54 = scmp.ge.s32.totalorder %s53, 2
      %s55 = scalar_select %p54, 0, %s53
      %s56 = sadd.s32 1, %s47
      %s57 = scalar_select %p54, %s56, %s47
      %p58 = scmp.ge.s32.totalorder %s57, 2
      %s59 = scalar_select %p58, 0, %s57
      %s60 = ssub.s32 %s47, %s59
      %p61 = scmp.eq.s32.totalorder %s60, 0
      %s63 = sadd.s32 %s62, 1
      %s64 = scalar_select %p61, %s62, %s63
      %p67 = pneg %p61
      %p68 = scmp.eq.s32.totalorder %s40, 3
      %p69 = por %p67, %p68
      %p70 = scmp.ne.s32.totalorder %s62, %s65
      %p71 = scmp.eq.s32.totalorder %s40, 0
      %p72 = por %p70, %p71
      %p73 = scmp.ne.s32.totalorder %s62, %s65
      %p74 = scmp.eq.s32.totalorder %s45, 3
      %p75 = por %p73, %p74
      %p76 = scmp.ne.s32.totalorder %s65, %s66
      %p77 = scmp.eq.s32.totalorder %s45, 0
      %p78 = por %p76, %p77
      %p79 = scmp.ne.s32.totalorder %s65, %s66
      %p80 = scmp.eq.s32.totalorder %s46, 3
      %p81 = por %p79, %p80
      %p83 = scmp.ne.s32.totalorder %s66, %s82
      %p84 = scmp.eq.s32.totalorder %s46, 0
      %p85 = por %p83, %p84
      %s86 = ssub.s32 %s47, %s59
      %p87 = scmp.eq.s32.totalorder %s86, 0
      %s89 = sadd.s32 %s88, 1
      %s90 = scalar_select %p87, %s88, %s89
      %p93 = pneg %p87
      %p94 = scmp.eq.s32.totalorder %s40, 3
      %p95 = por %p93, %p94
      %p96 = scmp.ne.s32.totalorder %s88, %s91
      %p97 = scmp.eq.s32.totalorder %s40, 0
      %p98 = por %p96, %p97
      %p99 = scmp.ne.s32.totalorder %s88, %s91
      %p100 = scmp.eq.s32.totalorder %s45, 3
      %p101 = por %p99, %p100
      %p102 = scmp.ne.s32.totalorder %s91, %s92
      %p103 = scmp.eq.s32.totalorder %s45, 0
      %p104 = por %p102, %p103
      %p105 = scmp.ne.s32.totalorder %s91, %s92
      %p106 = scmp.eq.s32.totalorder %s46, 3
      %p107 = por %p105, %p106
      %p109 = scmp.ne.s32.totalorder %s92, %s108
      %p110 = scmp.eq.s32.totalorder %s46, 0
      %p111 = por %p109, %p110
      %s112 = ssub.s32 %s47, %s59
      %p113 = scmp.eq.s32.totalorder %s112, 0
      %s115 = sadd.s32 %s114, 1
      %s116 = scalar_select %p113, %s114, %s115
      %p119 = pneg %p113
      %p120 = scmp.eq.s32.totalorder %s40, 3
      %p121 = por %p119, %p120
      %p122 = scmp.ne.s32.totalorder %s114, %s117
      %p123 = scmp.eq.s32.totalorder %s40, 0
      %p124 = por %p122, %p123
      %p125 = scmp.ne.s32.totalorder %s114, %s117
      %p126 = scmp.eq.s32.totalorder %s45, 3
      %p127 = por %p125, %p126
      %p128 = scmp.ne.s32.totalorder %s117, %s118
      %p129 = scmp.eq.s32.totalorder %s45, 0
      %p130 = por %p128, %p129
      %p131 = scmp.ne.s32.totalorder %s117, %s118
      %p132 = scmp.eq.s32.totalorder %s46, 3
      %p133 = por %p131, %p132
      %p135 = scmp.ne.s32.totalorder %s118, %s134
      %p136 = scmp.eq.s32.totalorder %s46, 0
      %p137 = por %p135, %p136
      %s138 = ssub.s32 %s47, %s59
      %p139 = scmp.eq.s32.totalorder %s138, 0
      %s141 = sadd.s32 %s140, 1
      %s142 = scalar_select %p139, %s140, %s141
      %p145 = pneg %p139
      %p146 = scmp.eq.s32.totalorder %s40, 3
      %p147 = por %p145, %p146
      %p148 = scmp.ne.s32.totalorder %s140, %s143
      %p149 = scmp.eq.s32.totalorder %s40, 0
      %p150 = por %p148, %p149
      %p151 = scmp.ne.s32.totalorder %s140, %s143
      %p152 = scmp.eq.s32.totalorder %s45, 3
      %p153 = por %p151, %p152
      %p154 = scmp.ne.s32.totalorder %s143, %s144
      %p155 = scmp.eq.s32.totalorder %s45, 0
      %p156 = por %p154, %p155
      %p157 = scmp.ne.s32.totalorder %s143, %s144
      %p158 = scmp.eq.s32.totalorder %s46, 3
      %p159 = por %p157, %p158
      %p161 = scmp.ne.s32.totalorder %s144, %s160
      %p162 = scmp.eq.s32.totalorder %s46, 0
      %p163 = por %p161, %p162
      %s164 = ssub.s32 %s48, %s55
      %p165 = scmp.eq.s32.totalorder %s164, 0
      %s167 = sadd.s32 %s166, 1
      %s168 = scalar_select %p165, %s166, %s167
      %p171 = pneg %p165
      %p172 = scmp.eq.s32.totalorder %s40, 3
      %p173 = por %p171, %p172
      %p174 = scmp.ne.s32.totalorder %s166, %s169
      %p175 = scmp.eq.s32.totalorder %s40, 0
      %p176 = por %p174, %p175
      %p177 = scmp.ne.s32.totalorder %s166, %s169
      %p178 = scmp.eq.s32.totalorder %s45, 3
      %p179 = por %p177, %p178
      %p180 = scmp.ne.s32.totalorder %s169, %s170
      %p181 = scmp.eq.s32.totalorder %s45, 0
      %p182 = por %p180, %p181
      %p183 = scmp.ne.s32.totalorder %s169, %s170
      %p184 = scmp.eq.s32.totalorder %s46, 3
      %p185 = por %p183, %p184
      %p187 = scmp.ne.s32.totalorder %s170, %s186
      %p188 = scmp.eq.s32.totalorder %s46, 0
      %p189 = por %p187, %p188
      %s190 = ssub.s32 %s48, %s55
      %p191 = scmp.eq.s32.totalorder %s190, 0
      %s193 = sadd.s32 %s192, 1
      %s194 = scalar_select %p191, %s192, %s193
      %p197 = pneg %p191
      %p198 = scmp.eq.s32.totalorder %s40, 3
      %p199 = por %p197, %p198
      %p200 = scmp.ne.s32.totalorder %s192, %s195
      %p201 = scmp.eq.s32.totalorder %s40, 0
      %p202 = por %p200, %p201
      %p203 = scmp.ne.s32.totalorder %s192, %s195
      %p204 = scmp.eq.s32.totalorder %s45, 3
      %p205 = por %p203, %p204
      %p206 = scmp.ne.s32.totalorder %s195, %s196
      %p207 = scmp.eq.s32.totalorder %s45, 0
      %p208 = por %p206, %p207
      %p209 = scmp.ne.s32.totalorder %s195, %s196
      %p210 = scmp.eq.s32.totalorder %s46, 3
      %p211 = por %p209, %p210
      %p213 = scmp.ne.s32.totalorder %s196, %s212
      %p214 = scmp.eq.s32.totalorder %s46, 0
      %p215 = por %p213, %p214
      %s216 = ssub.s32 %s48, %s55
      %p217 = scmp.eq.s32.totalorder %s216, 0
      %s219 = sadd.s32 %s218, 1
      %s220 = scalar_select %p217, %s218, %s219
      %p223 = pneg %p217
      %p224 = scmp.eq.s32.totalorder %s40, 3
      %p225 = por %p223, %p224
      %p226 = scmp.ne.s32.totalorder %s218, %s221
      %p227 = scmp.eq.s32.totalorder %s40, 0
      %p228 = por %p226, %p227
      %p229 = scmp.ne.s32.totalorder %s218, %s221
      %p230 = scmp.eq.s32.totalorder %s45, 3
      %p231 = por %p229, %p230
      %p232 = scmp.ne.s32.totalorder %s221, %s222
      %p233 = scmp.eq.s32.totalorder %s45, 0
      %p234 = por %p232, %p233
      %p235 = scmp.ne.s32.totalorder %s221, %s222
      %p236 = scmp.eq.s32.totalorder %s46, 3
      %p237 = por %p235, %p236
      %p239 = scmp.ne.s32.totalorder %s222, %s238
      %p240 = scmp.eq.s32.totalorder %s46, 0
      %p241 = por %p239, %p240
      %s242 = ssub.s32 %s48, %s55
      %p243 = scmp.eq.s32.totalorder %s242, 0
      %s245 = sadd.s32 %s244, 1
      %s246 = scalar_select %p243, %s244, %s245
      %p249 = pneg %p243
      %p250 = scmp.eq.s32.totalorder %s40, 3
      %p251 = por %p249, %p250
      %p252 = scmp.ne.s32.totalorder %s244, %s247
      %p253 = scmp.eq.s32.totalorder %s40, 0
      %p254 = por %p252, %p253
      %p255 = scmp.ne.s32.totalorder %s244, %s247
      %p256 = scmp.eq.s32.totalorder %s45, 3
      %p257 = por %p255, %p256
      %p258 = scmp.ne.s32.totalorder %s247, %s248
      %p259 = scmp.eq.s32.totalorder %s45, 0
      %p260 = por %p258, %p259
      %p261 = scmp.ne.s32.totalorder %s247, %s248
      %p262 = scmp.eq.s32.totalorder %s46, 3
      %p263 = por %p261, %p262
      %p265 = scmp.ne.s32.totalorder %s248, %s264
      %p266 = scmp.eq.s32.totalorder %s46, 0
      %p267 = por %p265, %p266
      %s269 = sadd.s32 %s268, 1
      %p272 = scmp.eq.s32.totalorder %s40, 3
      %p273 = scmp.ne.s32.totalorder %s268, %s270
      %p274 = scmp.eq.s32.totalorder %s40, 0
      %p275 = por %p273, %p274
      %p276 = scmp.ne.s32.totalorder %s268, %s270
      %p277 = scmp.eq.s32.totalorder %s45, 3
      %p278 = por %p276, %p277
      %p279 = scmp.ne.s32.totalorder %s270, %s271
      %p280 = scmp.eq.s32.totalorder %s45, 0
      %p281 = por %p279, %p280
      %p282 = scmp.ne.s32.totalorder %s270, %s271
      %p283 = scmp.eq.s32.totalorder %s46, 3
      %p284 = por %p282, %p283
      %p286 = scmp.ne.s32.totalorder %s271, %s285
      %p287 = scmp.eq.s32.totalorder %s46, 0
      %p288 = por %p286, %p287
      %s290 = sadd.s32 %s289, 1
      %p293 = scmp.eq.s32.totalorder %s40, 3
      %p294 = scmp.ne.s32.totalorder %s289, %s291
      %p295 = scmp.eq.s32.totalorder %s40, 0
      %p296 = por %p294, %p295
      %p297 = scmp.ne.s32.totalorder %s289, %s291
      %p298 = scmp.eq.s32.totalorder %s45, 3
      %p299 = por %p297, %p298
      %p300 = scmp.ne.s32.totalorder %s291, %s292
      %p301 = scmp.eq.s32.totalorder %s45, 0
      %p302 = por %p300, %p301
      %p303 = scmp.ne.s32.totalorder %s291, %s292
      %p304 = scmp.eq.s32.totalorder %s46, 3
      %p305 = por %p303, %p304
      %p307 = scmp.ne.s32.totalorder %s292, %s306
      %p308 = scmp.eq.s32.totalorder %s46, 0
      %p309 = por %p307, %p308
      %s311 = sadd.s32 %s310, 1
      %p314 = scmp.eq.s32.totalorder %s40, 3
      %p315 = scmp.ne.s32.totalorder %s310, %s312
      %p316 = scmp.eq.s32.totalorder %s40, 0
      %p317 = por %p315, %p316
      %p318 = scmp.ne.s32.totalorder %s310, %s312
      %p319 = scmp.eq.s32.totalorder %s45, 3
      %p320 = por %p318, %p319
      %p321 = scmp.ne.s32.totalorder %s312, %s313
      %p322 = scmp.eq.s32.totalorder %s45, 0
      %p323 = por %p321, %p322
      %p324 = scmp.ne.s32.totalorder %s312, %s313
      %p325 = scmp.eq.s32.totalorder %s46, 3
      %p326 = por %p324, %p325
      %p328 = scmp.ne.s32.totalorder %s313, %s327
      %p329 = scmp.eq.s32.totalorder %s46, 0
      %p330 = por %p328, %p329
      %s331 = ssub.s32 %s47, %s59
      %p332 = scmp.eq.s32.totalorder %s331, 0
      %s334 = sadd.s32 %s333, 1
      %s335 = scalar_select %p332, %s333, %s334
      %p338 = pneg %p332
      %p339 = scmp.eq.s32.totalorder %s40, 3
      %p340 = por %p338, %p339
      %p341 = scmp.ne.s32.totalorder %s333, %s336
      %p342 = scmp.eq.s32.totalorder %s40, 0
      %p343 = por %p341, %p342
      %p344 = scmp.ne.s32.totalorder %s333, %s336
      %p345 = scmp.eq.s32.totalorder %s45, 3
      %p346 = por %p344, %p345
      %p347 = scmp.ne.s32.totalorder %s336, %s337
      %p348 = scmp.eq.s32.totalorder %s45, 0
      %p349 = por %p347, %p348
      %p350 = scmp.ne.s32.totalorder %s336, %s337
      %p351 = scmp.eq.s32.totalorder %s46, 3
      %p352 = por %p350, %p351
      %p354 = scmp.ne.s32.totalorder %s337, %s353
      %p355 = scmp.eq.s32.totalorder %s46, 0
      %p356 = por %p354, %p355
      %s357 = ssub.s32 %s48, %s55
      %s358 = ssub.s32 %s47, %s59
      %s359 = sor.u32 %s357, %s358
      %p360 = scmp.eq.s32.totalorder %s359, 0
      %s362 = sadd.s32 %s361, 1
      %s363 = scalar_select %p360, %s361, %s362
      %p366 = pneg %p360
      %p367 = scmp.eq.s32.totalorder %s40, 3
      %p368 = por %p366, %p367
      %p369 = scmp.ne.s32.totalorder %s361, %s364
      %p370 = scmp.eq.s32.totalorder %s40, 0
      %p371 = por %p369, %p370
      %p372 = scmp.ne.s32.totalorder %s361, %s364
      %p373 = scmp.eq.s32.totalorder %s45, 3
      %p374 = por %p372, %p373
      %p375 = scmp.ne.s32.totalorder %s364, %s365
      %p376 = scmp.eq.s32.totalorder %s45, 0
      %p377 = por %p375, %p376
      %p378 = scmp.ne.s32.totalorder %s364, %s365
      %p379 = scmp.eq.s32.totalorder %s46, 3
      %p380 = por %p378, %p379
      %p382 = scmp.ne.s32.totalorder %s365, %s381
      %p383 = scmp.eq.s32.totalorder %s46, 0
      %p384 = por %p382, %p383
      %p385 = scmp.le.s32.totalorder 1, %s40
      %p386 = scmp.lt.s32.totalorder %s40, 5
      %p387 = pnand %p385, %p386
      %p388 = pneg %p387
      // Predicated region
      $region9: #{tpu_custom_call.1} parent=5 // pred_check
        _
      $region10: #{tpu_custom_call.1} parent=5 // pred_check_branch
        %390 = sbr.rel (%p387) target = $region12
      $region11: #{tpu_custom_call.1} parent=5 // pred_region
        %s391 = ssub.s32 %s40, 1
        // Predicated region
        $region13: #{tpu_custom_call.1} parent=11 // pred_check
          %p392 = pneg %p281
        $region14: #{tpu_custom_call.1} parent=11 // pred_check_branch
          %394 = sbr.rel (%p392) target = $region16
        $region15: #{tpu_custom_call.1} parent=11 // pred_region
          _
        $region16: #{tpu_custom_call.1} parent=11 // pred_fallthru
          _
        // Predicated region
        $region17: #{tpu_custom_call.1} parent=11 // pred_check
          %p395 = pneg %p302
        $region18: #{tpu_custom_call.1} parent=11 // pred_check_branch
          %397 = sbr.rel (%p395) target = $region20
        $region19: #{tpu_custom_call.1} parent=11 // pred_region
          _
        $region20: #{tpu_custom_call.1} parent=11 // pred_fallthru
          _
        // Predicated region
        $region21: #{tpu_custom_call.1} parent=11 // pred_check
          %p398 = pneg %p323
        $region22: #{tpu_custom_call.1} parent=11 // pred_check_branch
          %400 = sbr.rel (%p398) target = $region24
        $region23: #{tpu_custom_call.1} parent=11 // pred_region
          _
        $region24: #{tpu_custom_call.1} parent=11 // pred_fallthru
          _
      $region12: #{tpu_custom_call.1} parent=5 // pred_fallthru
        _
      %p401 = scmp.lt.s32.totalorder %s40, 4
      // Predicated region
      $region25: #{tpu_custom_call.1} parent=5 // pred_check
        %p402 = pneg %p401
      $region26: #{tpu_custom_call.1} parent=5 // pred_check_branch
        %404 = sbr.rel (%p402) target = $region28
      $region27: #{tpu_custom_call.1} parent=5 // pred_region
        // Predicated region
        $region29: #{tpu_custom_call.1} parent=27 // pred_check
          %p405 = pneg %p72
        $region30: #{tpu_custom_call.1} parent=27 // pred_check_branch
          %407 = sbr.rel (%p405) target = $region32
        $region31: #{tpu_custom_call.1} parent=27 // pred_region
          %s408 = sand.u32 %s62, 1
          %s409 = scalar_lea.sflag [#allocation4], %s408
          %s410 = sand.u32 %s62, 1
          %s411 = smul.addr %s410, 8
          %s412 = scalar_lea.vmem [#allocation3], %s411
          %414 = vsyncadd %s409, 0
          %s415 = smul.addr %s47, 8
          %s416 = scalar_lea.hbm %s0, %s415
          %s418 = sshll.u32 %s416, 4
          %s419 = int_to_ptr.hbm [resolvable:$true] %s418
          %s420 = sshll.u32 %s412, 4
          %s421 = int_to_ptr.vmem [resolvable:$true] %s420
          %423 = dma.hbm_to_vmem [thread:$0]  %s419, 128, %s421, %s409
        $region32: #{tpu_custom_call.1} parent=27 // pred_fallthru
          _
        // Predicated region
        $region33: #{tpu_custom_call.1} parent=27 // pred_check
          %p424 = pneg %p98
        $region34: #{tpu_custom_call.1} parent=27 // pred_check_branch
          %426 = sbr.rel (%p424) target = $region36
        $region35: #{tpu_custom_call.1} parent=27 // pred_region
          %s427 = sand.u32 %s40, 1
          %s428 = scalar_lea.sflag [#allocation7], %s427
          %s429 = sand.u32 %s88, 1
          %s430 = smul.addr %s429, 16
          %s431 = scalar_lea.vmem [#allocation6], %s430
          %433 = vsyncadd %s428, 0
          %s434 = smul.addr %s47, 2
          %s435 = smul.addr %s434, 8
          %s436 = scalar_lea.hbm %s1, %s435
          %s437 = sshll.u32 %s436, 4
          %s438 = int_to_ptr.hbm [resolvable:$true] %s437
          %s439 = sshll.u32 %s431, 4
          %s440 = int_to_ptr.vmem [resolvable:$true] %s439
          %445 = dma.hbm_to_vmem [thread:$0]  %s438, 256, %s440, %s428, 128, 128, 8
        $region36: #{tpu_custom_call.1} parent=27 // pred_fallthru
          _
        // Predicated region
        $region37: #{tpu_custom_call.1} parent=27 // pred_check
          %p446 = pneg %p124
        $region38: #{tpu_custom_call.1} parent=27 // pred_check_branch
          %448 = sbr.rel (%p446) target = $region40
        $region39: #{tpu_custom_call.1} parent=27 // pred_region
          %s449 = sand.u32 %s40, 1
          %s450 = scalar_lea.sflag [#allocation7], %s449
          %s451 = sand.u32 %s114, 1
          %s452 = smul.addr %s451, 16
          %s453 = scalar_lea.vmem [#allocation8], %s452
          %455 = vsyncadd %s450, 0
          %s456 = smul.addr %s47, 2
          %s457 = smul.addr %s456, 8
          %s458 = scalar_lea.hbm %s2, %s457
          %s459 = sshll.u32 %s458, 4
          %s460 = int_to_ptr.hbm [resolvable:$true] %s459
          %s461 = sshll.u32 %s453, 4
          %s462 = int_to_ptr.vmem [resolvable:$true] %s461
          %467 = dma.hbm_to_vmem [thread:$0]  %s460, 256, %s462, %s450, 128, 128, 8
        $region40: #{tpu_custom_call.1} parent=27 // pred_fallthru
          _
        // Predicated region
        $region41: #{tpu_custom_call.1} parent=27 // pred_check
          %p468 = pneg %p150
        $region42: #{tpu_custom_call.1} parent=27 // pred_check_branch
          %470 = sbr.rel (%p468) target = $region44
        $region43: #{tpu_custom_call.1} parent=27 // pred_region
          %s471 = sand.u32 %s40, 1
          %s472 = scalar_lea.sflag [#allocation10], %s471
          %s473 = sand.u32 %s140, 1
          %s474 = smul.addr %s473, 8
          %s475 = scalar_lea.vmem [#allocation9], %s474
          %477 = vsyncadd %s472, 0
          %s478 = smul.addr %s47, 8
          %s479 = scalar_lea.hbm %s3, %s478
          %s481 = sshll.u32 %s479, 4
          %s482 = int_to_ptr.hbm [resolvable:$true] %s481
          %s483 = sshll.u32 %s475, 4
          %s484 = int_to_ptr.vmem [resolvable:$true] %s483
          %486 = dma.hbm_to_vmem [thread:$0]  %s482, 128, %s484, %s472
        $region44: #{tpu_custom_call.1} parent=27 // pred_fallthru
          _
        // Predicated region
        $region45: #{tpu_custom_call.1} parent=27 // pred_check
          %p487 = pneg %p176
        $region46: #{tpu_custom_call.1} parent=27 // pred_check_branch
          %489 = sbr.rel (%p487) target = $region48
        $region47: #{tpu_custom_call.1} parent=27 // pred_region
          %s490 = sand.u32 %s40, 1
          %s491 = scalar_lea.sflag [#allocation10], %s490
          %s492 = sand.u32 %s166, 1
          %s493 = smul.addr %s492, 128
          %s494 = scalar_lea.vmem [#allocation11], %s493
          %496 = vsyncadd %s491, 0
          %s497 = smul.addr %s48, 16
          %s498 = smul.addr %s497, 8
          %s499 = scalar_lea.hbm %s4, %s498
          %s500 = sshll.u32 %s499, 4
          %s501 = int_to_ptr.hbm [resolvable:$true] %s500
          %s502 = sshll.u32 %s494, 4
          %s503 = int_to_ptr.vmem [resolvable:$true] %s502
          %508 = dma.hbm_to_vmem [thread:$0]  %s501, 2048, %s503, %s491, 128, 128, 8
        $region48: #{tpu_custom_call.1} parent=27 // pred_fallthru
          _
        // Predicated region
        $region49: #{tpu_custom_call.1} parent=27 // pred_check
          %p509 = pneg %p202
        $region50: #{tpu_custom_call.1} parent=27 // pred_check_branch
          %511 = sbr.rel (%p509) target = $region52
        $region51: #{tpu_custom_call.1} parent=27 // pred_region
          %s512 = sand.u32 %s40, 1
          %s513 = scalar_lea.sflag [#allocation13], %s512
          %s514 = sand.u32 %s192, 1
          %s515 = smul.addr %s514, 128
          %s516 = scalar_lea.vmem [#allocation12], %s515
          %518 = vsyncadd %s513, 0
          %s519 = smul.addr %s48, 16
          %s520 = smul.addr %s519, 8
          %s521 = scalar_lea.hbm %s5, %s520
          %s522 = sshll.u32 %s521, 4
          %s523 = int_to_ptr.hbm [resolvable:$true] %s522
          %s524 = sshll.u32 %s516, 4
          %s525 = int_to_ptr.vmem [resolvable:$true] %s524
          %530 = dma.hbm_to_vmem [thread:$0]  %s523, 2048, %s525, %s513, 128, 128, 8
        $region52: #{tpu_custom_call.1} parent=27 // pred_fallthru
          _
        // Predicated region
        $region53: #{tpu_custom_call.1} parent=27 // pred_check
          %p531 = pneg %p228
        $region54: #{tpu_custom_call.1} parent=27 // pred_check_branch
          %533 = sbr.rel (%p531) target = $region56
        $region55: #{tpu_custom_call.1} parent=27 // pred_region
          %s534 = sand.u32 %s40, 1
          %s535 = scalar_lea.sflag [#allocation13], %s534
          %s536 = sand.u32 %s218, 1
          %s537 = smul.addr %s536, 128
          %s538 = scalar_lea.vmem [#allocation14], %s537
          %540 = vsyncadd %s535, 0
          %s541 = smul.addr %s48, 16
          %s542 = smul.addr %s541, 8
          %s543 = scalar_lea.hbm %s6, %s542
          %s544 = sshll.u32 %s543, 4
          %s545 = int_to_ptr.hbm [resolvable:$true] %s544
          %s546 = sshll.u32 %s538, 4
          %s547 = int_to_ptr.vmem [resolvable:$true] %s546
          %552 = dma.hbm_to_vmem [thread:$0]  %s545, 2048, %s547, %s535, 128, 128, 8
        $region56: #{tpu_custom_call.1} parent=27 // pred_fallthru
          _
        // Predicated region
        $region57: #{tpu_custom_call.1} parent=27 // pred_check
          %p553 = pneg %p254
        $region58: #{tpu_custom_call.1} parent=27 // pred_check_branch
          %555 = sbr.rel (%p553) target = $region60
        $region59: #{tpu_custom_call.1} parent=27 // pred_region
          %s556 = sand.u32 %s244, 1
          %s557 = scalar_lea.sflag [#allocation16], %s556
          %s558 = sand.u32 %s244, 1
          %s559 = smul.addr %s558, 128
          %s560 = scalar_lea.vmem [#allocation15], %s559
          %562 = vsyncadd %s557, 0
          %s563 = smul.addr %s48, 16
          %s564 = smul.addr %s563, 8
          %s565 = scalar_lea.hbm %s7, %s564
          %s566 = sshll.u32 %s565, 4
          %s567 = int_to_ptr.hbm [resolvable:$true] %s566
          %s568 = sshll.u32 %s560, 4
          %s569 = int_to_ptr.vmem [resolvable:$true] %s568
          %574 = dma.hbm_to_vmem [thread:$0]  %s567, 2048, %s569, %s557, 128, 128, 8
        $region60: #{tpu_custom_call.1} parent=27 // pred_fallthru
          _
      $region28: #{tpu_custom_call.1} parent=5 // pred_fallthru
        _
      %p575 = scmp.le.s32.totalorder 1, %s40
      %p576 = scmp.lt.s32.totalorder %s40, 5
      %p577 = pnand %p575, %p576
      %p578 = pneg %p577
      // Predicated region
      $region61: #{tpu_custom_call.1} parent=5 // pred_check
        _
      $region62: #{tpu_custom_call.1} parent=5 // pred_check_branch
        %580 = sbr.rel (%p577) target = $region64
      $region63: #{tpu_custom_call.1} parent=5 // pred_region
        %s581 = ssub.s32 %s40, 1
        %s582 = sand.u32 %s65, 1
        %s583 = scalar_lea.sflag [#allocation4], %s582
        %s584 = sand.u32 %s65, 1
        %s585 = smul.addr %s584, 8
        %s586 = scalar_lea.vmem [#allocation3], %s585
        // Predicated region
        $region65: #{tpu_custom_call.1} parent=63 // pred_check
          %p587 = pneg %p78
        $region66: #{tpu_custom_call.1} parent=63 // pred_check_branch
          %589 = sbr.rel (%p587) target = $region68
        $region67: #{tpu_custom_call.1} parent=63 // pred_region
          %591 = dma.done %s583, 128
        $region68: #{tpu_custom_call.1} parent=63 // pred_fallthru
          _
        %s592 = sand.u32 %s45, 1
        %s593 = scalar_lea.sflag [#allocation7], %s592
        %s594 = sand.u32 %s91, 1
        %s595 = smul.addr %s594, 16
        %s596 = scalar_lea.vmem [#allocation6], %s595
        // Predicated region
        $region69: #{tpu_custom_call.1} parent=63 // pred_check
          %p597 = pneg %p104
        $region70: #{tpu_custom_call.1} parent=63 // pred_check_branch
          %599 = sbr.rel (%p597) target = $region72
        $region71: #{tpu_custom_call.1} parent=63 // pred_region
          %601 = dma.done %s593, 256
        $region72: #{tpu_custom_call.1} parent=63 // pred_fallthru
          _
        %s602 = sand.u32 %s45, 1
        %s603 = scalar_lea.sflag [#allocation7], %s602
        %s604 = sand.u32 %s117, 1
        %s605 = smul.addr %s604, 16
        %s606 = scalar_lea.vmem [#allocation8], %s605
        // Predicated region
        $region73: #{tpu_custom_call.1} parent=63 // pred_check
          %p607 = pneg %p130
        $region74: #{tpu_custom_call.1} parent=63 // pred_check_branch
          %609 = sbr.rel (%p607) target = $region76
        $region75: #{tpu_custom_call.1} parent=63 // pred_region
          %611 = dma.done %s603, 256
        $region76: #{tpu_custom_call.1} parent=63 // pred_fallthru
          _
        %s612 = sand.u32 %s45, 1
        %s613 = scalar_lea.sflag [#allocation10], %s612
        %s614 = sand.u32 %s143, 1
        %s615 = smul.addr %s614, 8
        %s616 = scalar_lea.vmem [#allocation9], %s615
        // Predicated region
        $region77: #{tpu_custom_call.1} parent=63 // pred_check
          %p617 = pneg %p156
        $region78: #{tpu_custom_call.1} parent=63 // pred_check_branch
          %619 = sbr.rel (%p617) target = $region80
        $region79: #{tpu_custom_call.1} parent=63 // pred_region
          %621 = dma.done %s613, 128
        $region80: #{tpu_custom_call.1} parent=63 // pred_fallthru
          _
        %s622 = sand.u32 %s45, 1
        %s623 = scalar_lea.sflag [#allocation10], %s622
        %s624 = sand.u32 %s169, 1
        %s625 = smul.addr %s624, 128
        %s626 = scalar_lea.vmem [#allocation11], %s625
        // Predicated region
        $region81: #{tpu_custom_call.1} parent=63 // pred_check
          %p627 = pneg %p182
        $region82: #{tpu_custom_call.1} parent=63 // pred_check_branch
          %629 = sbr.rel (%p627) target = $region84
        $region83: #{tpu_custom_call.1} parent=63 // pred_region
          %631 = dma.done %s623, 2048
        $region84: #{tpu_custom_call.1} parent=63 // pred_fallthru
          _
        %s632 = sand.u32 %s45, 1
        %s633 = scalar_lea.sflag [#allocation13], %s632
        %s634 = sand.u32 %s195, 1
        %s635 = smul.addr %s634, 128
        %s636 = scalar_lea.vmem [#allocation12], %s635
        // Predicated region
        $region85: #{tpu_custom_call.1} parent=63 // pred_check
          %p637 = pneg %p208
        $region86: #{tpu_custom_call.1} parent=63 // pred_check_branch
          %639 = sbr.rel (%p637) target = $region88
        $region87: #{tpu_custom_call.1} parent=63 // pred_region
          %641 = dma.done %s633, 2048
        $region88: #{tpu_custom_call.1} parent=63 // pred_fallthru
          _
        %s642 = sand.u32 %s45, 1
        %s643 = scalar_lea.sflag [#allocation13], %s642
        %s644 = sand.u32 %s221, 1
        %s645 = smul.addr %s644, 128
        %s646 = scalar_lea.vmem [#allocation14], %s645
        // Predicated region
        $region89: #{tpu_custom_call.1} parent=63 // pred_check
          %p647 = pneg %p234
        $region90: #{tpu_custom_call.1} parent=63 // pred_check_branch
          %649 = sbr.rel (%p647) target = $region92
        $region91: #{tpu_custom_call.1} parent=63 // pred_region
          %651 = dma.done %s643, 2048
        $region92: #{tpu_custom_call.1} parent=63 // pred_fallthru
          _
        %s652 = sand.u32 %s247, 1
        %s653 = scalar_lea.sflag [#allocation16], %s652
        %s654 = sand.u32 %s247, 1
        %s655 = smul.addr %s654, 128
        %s656 = scalar_lea.vmem [#allocation15], %s655
        // Predicated region
        $region93: #{tpu_custom_call.1} parent=63 // pred_check
          %p657 = pneg %p260
        $region94: #{tpu_custom_call.1} parent=63 // pred_check_branch
          %659 = sbr.rel (%p657) target = $region96
        $region95: #{tpu_custom_call.1} parent=63 // pred_region
          %661 = dma.done %s653, 2048
        $region96: #{tpu_custom_call.1} parent=63 // pred_fallthru
          _
        %s662 = sand.u32 %s65, 1
        %s663 = scalar_lea.sflag [#allocation4], %s662
        %s664 = sand.u32 %s65, 1
        %s665 = smul.addr %s664, 8
        %s666 = scalar_lea.vmem [#allocation3], %s665
        %p667 = pneg %p78
        %p668 = pneg %p75
        %s669 = sand.u32 %s45, 1
        %s670 = scalar_lea.sflag [#allocation7], %s669
        %s671 = sand.u32 %s91, 1
        %s672 = smul.addr %s671, 16
        %s673 = scalar_lea.vmem [#allocation6], %s672
        %p674 = pneg %p104
        %p675 = pneg %p101
        %s676 = sand.u32 %s45, 1
        %s677 = scalar_lea.sflag [#allocation7], %s676
        %s678 = sand.u32 %s117, 1
        %s679 = smul.addr %s678, 16
        %s680 = scalar_lea.vmem [#allocation8], %s679
        %p681 = pneg %p130
        %p682 = pneg %p127
        %s683 = sand.u32 %s45, 1
        %s684 = scalar_lea.sflag [#allocation10], %s683
        %s685 = sand.u32 %s143, 1
        %s686 = smul.addr %s685, 8
        %s687 = scalar_lea.vmem [#allocation9], %s686
        %p688 = pneg %p156
        %p689 = pneg %p153
        %s690 = sand.u32 %s45, 1
        %s691 = scalar_lea.sflag [#allocation10], %s690
        %s692 = sand.u32 %s169, 1
        %s693 = smul.addr %s692, 128
        %s694 = scalar_lea.vmem [#allocation11], %s693
        %p695 = pneg %p182
        %p696 = pneg %p179
        %s697 = sand.u32 %s45, 1
        %s698 = scalar_lea.sflag [#allocation13], %s697
        %s699 = sand.u32 %s195, 1
        %s700 = smul.addr %s699, 128
        %s701 = scalar_lea.vmem [#allocation12], %s700
        %p702 = pneg %p208
        %p703 = pneg %p205
        %s704 = sand.u32 %s45, 1
        %s705 = scalar_lea.sflag [#allocation13], %s704
        %s706 = sand.u32 %s221, 1
        %s707 = smul.addr %s706, 128
        %s708 = scalar_lea.vmem [#allocation14], %s707
        %p709 = pneg %p234
        %p710 = pneg %p231
        %s711 = sand.u32 %s247, 1
        %s712 = scalar_lea.sflag [#allocation16], %s711
        %s713 = sand.u32 %s247, 1
        %s714 = smul.addr %s713, 128
        %s715 = scalar_lea.vmem [#allocation15], %s714
        %p716 = pneg %p260
        %p717 = pneg %p257
        %p718 = pneg %p281
        %p719 = pneg %p278
        %p720 = pneg %p302
        %p721 = pneg %p299
        %p722 = pneg %p323
        %p723 = pneg %p320
        %p724 = pneg %p349
        %p725 = pneg %p346
        %s726 = sand.u32 %s336, 1
        %s727 = scalar_lea.sflag [#allocation5], %s726
        %s728 = sand.u32 %s336, 1
        %s729 = smul.addr %s728, 8
        %s730 = scalar_lea.vmem [#allocation17], %s729
        %p731 = pneg %p377
        %p732 = pneg %p374
        %s733 = sand.u32 %s364, 1
        %s734 = scalar_lea.sflag [#allocation19], %s733
        %s735 = sand.u32 %s364, 1
        %s736 = smul.addr %s735, 8
        %s737 = scalar_lea.vmem [#allocation18], %s736
        %p738 = scmp.eq.s32.totalorder %s50, 0
        // Predicated region
        $region97: #{tpu_custom_call.1} parent=63 // pred_check
          %p739 = pneg %p738
        $region98: #{tpu_custom_call.1} parent=63 // pred_check_branch
          %741 = sbr.rel (%p739) target = $region100
        $region99: #{tpu_custom_call.1} parent=63 // pred_region
          %742 = vst [vmem:[#allocation2] sm:$0xff] 0.0
        $region100: #{tpu_custom_call.1} parent=63 // pred_fallthru
          _
        %v743 = vld [vmem:[%s586] sm:$0xff]
        %v744 = vld [vmem:[%s596] sm:$0xff]
        %v745 = vld [vmem:[%s596 + $0x8] sm:$0xff]
        %v746 = vld [vmem:[%s606] sm:$0xff]
        %v747 = vld [vmem:[%s606 + $0x8] sm:$0xff]
        %v748 = vld [vmem:[%s626] sm:$0xff]
        %v749 = vld [vmem:[%s626 + $0x8] sm:$0xff]
        %v750 = vld [vmem:[%s626 + $0x10] sm:$0xff]
        %v751 = vld [vmem:[%s626 + $0x18] sm:$0xff]
        %v752 = vld [vmem:[%s626 + $0x20] sm:$0xff]
        %v753 = vld [vmem:[%s626 + $0x28] sm:$0xff]
        %v754 = vld [vmem:[%s626 + $0x30] sm:$0xff]
        %v755 = vld [vmem:[%s626 + $0x38] sm:$0xff]
        %v756 = vld [vmem:[%s626 + $0x40] sm:$0xff]
        %v757 = vld [vmem:[%s626 + $0x48] sm:$0xff]
        %v758 = vld [vmem:[%s626 + $0x50] sm:$0xff]
        %v759 = vld [vmem:[%s626 + $0x58] sm:$0xff]
        %v760 = vld [vmem:[%s626 + $0x60] sm:$0xff]
        %v761 = vld [vmem:[%s626 + $0x68] sm:$0xff]
        %v762 = vld [vmem:[%s626 + $0x70] sm:$0xff]
        %v763 = vld [vmem:[%s626 + $0x78] sm:$0xff]
        %764 = vmatpush.msra.mxu0 %v763
        %765 = vmatpush.msra.mxu0 %v762
        %766 = vmatpush.msra.mxu0 %v761
        %767 = vmatpush.msra.mxu0 %v760
        %768 = vmatpush.msra.mxu0 %v759
        %769 = vmatpush.msra.mxu0 %v758
        %770 = vmatpush.msra.mxu0 %v757
        %771 = vmatpush.msra.mxu0 %v756
        %772 = vmatpush.msra.mxu0 %v755
        %773 = vmatpush.msra.mxu0 %v754
        %774 = vmatpush.msra.mxu0 %v753
        %775 = vmatpush.msra.mxu0 %v752
        %776 = vmatpush.msra.mxu0 %v751
        %777 = vmatpush.msra.mxu0 %v750
        %778 = vmatpush.msra.mxu0 %v749
        %779 = vmatpush.msra.mxu0 %v748
        %780 = vmatmul.f32.gmra.mxu0 %v743
        %v781 = vpop.f32.mrf.mxu0
        %v782 = vadd.f32 0.0, %v781
        %783 = vdwg.mxu0
        %v784 = vld [vmem:[%s636] sm:$0xff]
        %v785 = vld [vmem:[%s636 + $0x8] sm:$0xff]
        %v786 = vld [vmem:[%s636 + $0x10] sm:$0xff]
        %v787 = vld [vmem:[%s636 + $0x18] sm:$0xff]
        %v788 = vld [vmem:[%s636 + $0x20] sm:$0xff]
        %v789 = vld [vmem:[%s636 + $0x28] sm:$0xff]
        %v790 = vld [vmem:[%s636 + $0x30] sm:$0xff]
        %v791 = vld [vmem:[%s636 + $0x38] sm:$0xff]
        %v792 = vld [vmem:[%s636 + $0x40] sm:$0xff]
        %v793 = vld [vmem:[%s636 + $0x48] sm:$0xff]
        %v794 = vld [vmem:[%s636 + $0x50] sm:$0xff]
        %v795 = vld [vmem:[%s636 + $0x58] sm:$0xff]
        %v796 = vld [vmem:[%s636 + $0x60] sm:$0xff]
        %v797 = vld [vmem:[%s636 + $0x68] sm:$0xff]
        %v798 = vld [vmem:[%s636 + $0x70] sm:$0xff]
        %v799 = vld [vmem:[%s636 + $0x78] sm:$0xff]
        %800 = vmatpush.msra.mxu0 %v799
        %801 = vmatpush.msra.mxu0 %v798
        %802 = vmatpush.msra.mxu0 %v797
        %803 = vmatpush.msra.mxu0 %v796
        %804 = vmatpush.msra.mxu0 %v795
        %805 = vmatpush.msra.mxu0 %v794
        %806 = vmatpush.msra.mxu0 %v793
        %807 = vmatpush.msra.mxu0 %v792
        %808 = vmatpush.msra.mxu0 %v791
        %809 = vmatpush.msra.mxu0 %v790
        %810 = vmatpush.msra.mxu0 %v789
        %811 = vmatpush.msra.mxu0 %v788
        %812 = vmatpush.msra.mxu0 %v787
        %813 = vmatpush.msra.mxu0 %v786
        %814 = vmatpush.msra.mxu0 %v785
        %815 = vmatpush.msra.mxu0 %v784
        %816 = vmatmul.f32.gmra.mxu0 %v744
        %v817 = vpop.f32.mrf.mxu0
        %v818 = vadd.f32 0.0, %v817
        %819 = vmatmul.f32.gmra.mxu0 %v745
        %v820 = vpop.f32.mrf.mxu0
        %v821 = vadd.f32 0.0, %v820
        %822 = vdwg.mxu0
        %v823 = vld [vmem:[%s646] sm:$0xff]
        %v824 = vld [vmem:[%s646 + $0x8] sm:$0xff]
        %v825 = vld [vmem:[%s646 + $0x10] sm:$0xff]
        %v826 = vld [vmem:[%s646 + $0x18] sm:$0xff]
        %v827 = vld [vmem:[%s646 + $0x20] sm:$0xff]
        %v828 = vld [vmem:[%s646 + $0x28] sm:$0xff]
        %v829 = vld [vmem:[%s646 + $0x30] sm:$0xff]
        %v830 = vld [vmem:[%s646 + $0x38] sm:$0xff]
        %v831 = vld [vmem:[%s646 + $0x40] sm:$0xff]
        %v832 = vld [vmem:[%s646 + $0x48] sm:$0xff]
        %v833 = vld [vmem:[%s646 + $0x50] sm:$0xff]
        %v834 = vld [vmem:[%s646 + $0x58] sm:$0xff]
        %v835 = vld [vmem:[%s646 + $0x60] sm:$0xff]
        %v836 = vld [vmem:[%s646 + $0x68] sm:$0xff]
        %v837 = vld [vmem:[%s646 + $0x70] sm:$0xff]
        %v838 = vld [vmem:[%s646 + $0x78] sm:$0xff]
        %839 = vmatpush.msra.mxu0 %v838
        %840 = vmatpush.msra.mxu0 %v837
        %841 = vmatpush.msra.mxu0 %v836
        %842 = vmatpush.msra.mxu0 %v835
        %843 = vmatpush.msra.mxu0 %v834
        %844 = vmatpush.msra.mxu0 %v833
        %845 = vmatpush.msra.mxu0 %v832
        %846 = vmatpush.msra.mxu0 %v831
        %847 = vmatpush.msra.mxu0 %v830
        %848 = vmatpush.msra.mxu0 %v829
        %849 = vmatpush.msra.mxu0 %v828
        %850 = vmatpush.msra.mxu0 %v827
        %851 = vmatpush.msra.mxu0 %v826
        %852 = vmatpush.msra.mxu0 %v825
        %853 = vmatpush.msra.mxu0 %v824
        %854 = vmatpush.msra.mxu0 %v823
        %855 = vmatmul.f32.gmra.mxu0 %v746
        %v856 = vpop.f32.mrf.mxu0
        %v857 = vadd.f32 0.0, %v856
        %858 = vmatmul.f32.gmra.mxu0 %v747
        %v859 = vpop.f32.mrf.mxu0
        %v860 = vadd.f32 0.0, %v859
        %861 = vdwg.mxu0
        %862 = vmatpush.xpose.msra.mxu0 0.0
        %863 = vmatpush.xpose.msra.mxu0 0.0
        %864 = vmatpush.xpose.msra.mxu0 0.0
        %865 = vmatpush.xpose.msra.mxu0 0.0
        %866 = vmatpush.xpose.msra.mxu0 0.0
        %867 = vmatpush.xpose.msra.mxu0 0.0
        %868 = vmatpush.xpose.msra.mxu0 0.0
        %869 = vmatpush.xpose.msra.mxu0 0.0
        %870 = vmatpush.xpose.msra.mxu0 0.0
        %871 = vmatpush.xpose.msra.mxu0 0.0
        %872 = vmatpush.xpose.msra.mxu0 0.0
        %873 = vmatpush.xpose.msra.mxu0 0.0
        %874 = vmatpush.xpose.msra.mxu0 0.0
        %875 = vmatpush.xpose.msra.mxu0 0.0
        %876 = vmatpush.xpose.msra.mxu0 %v821
        %877 = vmatpush.xpose.msra.mxu0 %v818
        %878 = vmatmul.f32.gmra.mxu0 %v782
        %v879 = vpop.f32.mrf.mxu0
        %v880 = vadd.f32 0.0, %v879
        %881 = vdwg.mxu0
        %v882 = vmul.f32 %v880, 0.088388346
        %v883 = vld [vmem:[%s616] sm:$0xff]
        %vm884 = vcmp.ne.f32.partialorder %v883, 0.0
        %v885 = vsel %vm884, -1e+30, %v882
        %vm886 = vcmask 130048
        %v887 = vsel %vm886, %v885, -inf
        %888 = vmax.xlane.f32.xlu0 %v887
        %v889 = vpop.xlane.xlu0 %888
        %v890 = vsub.f32 %v885, %v889
        %v891 = vmul.f32 %v890, 1.442695
        %v892 = vpow.pop %v891
        %v893 = vsel %vm886, %v892, 0.0
        %894 = vadd.xlane.f32.xlu0 %v893
        %v895 = vpop.xlane.xlu0 %894
        %v896 = vrcp.pop %v895
        %v897 = vmul.f32 %v895, %v896
        %v898 = vsub.f32 1.0, %v897
        %v899 = vmul.f32 %v896, %v898
        %v900 = vadd.f32 %v896, %v899
        %vm901 = vweird.f32 %v895
        %vm902 = vweird.f32 %v896
        %vm903 = vmor %vm901, %vm902
        %v904 = vsel %vm903, %v896, %v900
        %v905 = vand.u32 2147483647, %v895
        %vm906 = vcmp.eq.f32.partialorder %v905, 8.507059e+37
        %v907 = vand.u32 %v895, 2147483648
        %v908 = vor.u32 1.1754944e-38, %v907
        %v909 = vsel %vm906, %v908, %v904
        %v910 = vmul.f32 %v892, %v909
        %911 = vst.msk [vmem:[%s737] sm:$0xff] %vm886, %v910
        %v913 = vsel %vm886, %v910, 0
        %915 = vmatpush.msra.mxu0 0.0
        %916 = vmatpush.msra.mxu0 0.0
        %917 = vmatpush.msra.mxu0 0.0
        %918 = vmatpush.msra.mxu0 0.0
        %919 = vmatpush.msra.mxu0 0.0
        %920 = vmatpush.msra.mxu0 0.0
        %921 = vmatpush.msra.mxu0 0.0
        %922 = vmatpush.msra.mxu0 0.0
        %923 = vmatpush.msra.mxu0 0.0
        %924 = vmatpush.msra.mxu0 0.0
        %925 = vmatpush.msra.mxu0 0.0
        %926 = vmatpush.msra.mxu0 0.0
        %927 = vmatpush.msra.mxu0 0.0
        %928 = vmatpush.msra.mxu0 0.0
        %929 = vmatpush.msra.mxu0 %v860
        %930 = vmatpush.msra.mxu0 %v857
        %931 = vmatmul.f32.gmra.mxu0 %v913
        %v932 = vpop.f32.mrf.mxu0
        %v933 = vadd.f32 0.0, %v932
        %934 = vdwg.mxu0
        %v935 = vld [vmem:[#allocation2] sm:$0xff]
        %v936 = vld [vmem:[%s656] sm:$0xff]
        %v937 = vld [vmem:[%s656 + $0x8] sm:$0xff]
        %v938 = vld [vmem:[%s656 + $0x10] sm:$0xff]
        %v939 = vld [vmem:[%s656 + $0x18] sm:$0xff]
        %v940 = vld [vmem:[%s656 + $0x20] sm:$0xff]
        %v941 = vld [vmem:[%s656 + $0x28] sm:$0xff]
        %v942 = vld [vmem:[%s656 + $0x30] sm:$0xff]
        %v943 = vld [vmem:[%s656 + $0x38] sm:$0xff]
        %v944 = vld [vmem:[%s656 + $0x40] sm:$0xff]
        %v945 = vld [vmem:[%s656 + $0x48] sm:$0xff]
        %v946 = vld [vmem:[%s656 + $0x50] sm:$0xff]
        %v947 = vld [vmem:[%s656 + $0x58] sm:$0xff]
        %v948 = vld [vmem:[%s656 + $0x60] sm:$0xff]
        %v949 = vld [vmem:[%s656 + $0x68] sm:$0xff]
        %v950 = vld [vmem:[%s656 + $0x70] sm:$0xff]
        %v951 = vld [vmem:[%s656 + $0x78] sm:$0xff]
        %952 = vmatpush.msra.mxu0 %v951
        %953 = vmatpush.msra.mxu0 %v950
        %954 = vmatpush.msra.mxu0 %v949
        %955 = vmatpush.msra.mxu0 %v948
        %956 = vmatpush.msra.mxu0 %v947
        %957 = vmatpush.msra.mxu0 %v946
        %958 = vmatpush.msra.mxu0 %v945
        %959 = vmatpush.msra.mxu0 %v944
        %960 = vmatpush.msra.mxu0 %v943
        %961 = vmatpush.msra.mxu0 %v942
        %962 = vmatpush.msra.mxu0 %v941
        %963 = vmatpush.msra.mxu0 %v940
        %964 = vmatpush.msra.mxu0 %v939
        %965 = vmatpush.msra.mxu0 %v938
        %966 = vmatpush.msra.mxu0 %v937
        %967 = vmatpush.msra.mxu0 %v936
        %968 = vmatmul.f32.gmra.mxu0 %v933
        %v969 = vpop.f32.mrf.mxu0
        %v970 = vadd.f32 0.0, %v969
        %971 = vdwg.mxu0
        %v972 = vadd.f32 %v935, %v970
        %973 = vst [vmem:[#allocation2] sm:$0xff] %v972
        %p974 = scmp.eq.s32.totalorder %s50, 1
        // Predicated region
        $region101: #{tpu_custom_call.1} parent=63 // pred_check
          %p975 = pneg %p974
        $region102: #{tpu_custom_call.1} parent=63 // pred_check_branch
          %977 = sbr.rel (%p975) target = $region104
        $region103: #{tpu_custom_call.1} parent=63 // pred_region
          %v978 = vld [vmem:[#allocation2] sm:$0xff]
          %v979 = vld [vmem:[%s8] sm:$0x1]
          %v981 = vperm.slane %v979, 0
          %v983 = vadd.f32 %v978, %v981
          %v984 = vadd.f32 %v983, %v743
          %985 = vadd.xlane.f32.xlu0 %v984
          %v986 = vpop.xlane.xlu0 %985
          %v987 = vrcp.pop 128.0
          %v988 = vmul.f32 128.0, %v987
          %v989 = vsub.f32 1.0, %v988
          %v990 = vmul.f32 %v987, %v989
          %v991 = vadd.f32 %v987, %v990
          %vm992 = vweird.f32 %v987
          %v993 = vsel %vm992, %v987, %v991
          %v994 = vmul.f32 %v986, %v993
          %v995 = vsub.f32 %v984, %v994
          %v996 = vmul.f32 %v995, %v995
          %997 = vadd.xlane.f32.xlu0 %v996
          %v998 = vpop.xlane.xlu0 %997
          %v999 = vrcp.pop 127.0
          %v1000 = vmul.f32 127.0, %v999
          %v1001 = vsub.f32 1.0, %v1000
          %v1002 = vmul.f32 %v999, %v1001
          %v1003 = vadd.f32 %v999, %v1002
          %vm1004 = vweird.f32 %v999
          %v1005 = vsel %vm1004, %v999, %v1003
          %v1006 = vmul.f32 %v998, %v1005
          %v1007 = vrsqrt.pop %v1006
          %v1008 = vmul.f32 %v1007, %v1006
          %v1009 = vmul.f32 %v1008, %v1007
          %v1010 = vmul.f32 0.5, %v1009
          %v1011 = vsub.f32 1.5, %v1010
          %v1012 = vmul.f32 %v1007, %v1011
          %v1013 = vmul.f32 %v1006, %v1012
          %vm1014 = vcmp.eq.f32.partialorder %v1006, inf
          %v1015 = vsel %vm1014, %v1006, %v1013
          %vm1016 = vcmp.eq.f32.partialorder %v1006, 0.0
          %v1017 = vand.u32 %v1006, 2147483648
          %v1018 = vsel %vm1016, %v1017, %v1015
          %v1019 = vadd.f32 %v1018, 0.001
          %v1020 = vrcp.pop %v1019
          %v1021 = vmul.f32 %v1019, %v1020
          %v1022 = vsub.f32 1.0, %v1021
          %v1023 = vmul.f32 %v1020, %v1022
          %v1024 = vadd.f32 %v1020, %v1023
          %vm1025 = vweird.f32 %v1019
          %vm1026 = vweird.f32 %v1020
          %vm1027 = vmor %vm1025, %vm1026
          %v1028 = vsel %vm1027, %v1020, %v1024
          %v1029 = vand.u32 2147483647, %v1019
          %vm1030 = vcmp.eq.f32.partialorder %v1029, 8.507059e+37
          %v1031 = vand.u32 %v1019, 2147483648
          %v1032 = vor.u32 1.1754944e-38, %v1031
          %v1033 = vsel %vm1030, %v1032, %v1028
          %v1034 = vmul.f32 %v995, %v1033
          %v1035 = vld [vmem:[%s9] sm:$0x1]
          %v1037 = vperm.slane %v1035, 0
          %v1039 = vmul.f32 %v1034, %v1037
          %v1040 = vld [vmem:[%s10] sm:$0x1]
          %v1042 = vperm.slane %v1040, 0
          %v1044 = vadd.f32 %v1039, %v1042
          %1045 = vst [vmem:[%s730] sm:$0xff] %v1044
        $region104: #{tpu_custom_call.1} parent=63 // pred_fallthru
          _
        %s1046 = sand.u32 %s336, 1
        %s1047 = scalar_lea.sflag [#allocation5], %s1046
        %s1048 = sand.u32 %s336, 1
        %s1049 = smul.addr %s1048, 8
        %s1050 = scalar_lea.vmem [#allocation17], %s1049
        %s1051 = sand.u32 %s364, 1
        %s1052 = scalar_lea.sflag [#allocation19], %s1051
        %s1053 = sand.u32 %s364, 1
        %s1054 = smul.addr %s1053, 8
        %s1055 = scalar_lea.vmem [#allocation18], %s1054
        // Predicated region
        $region105: #{tpu_custom_call.1} parent=63 // pred_check
          %p1056 = pneg %p346
        $region106: #{tpu_custom_call.1} parent=63 // pred_check_branch
          %1058 = sbr.rel (%p1056) target = $region108
        $region107: #{tpu_custom_call.1} parent=63 // pred_region
          %1060 = vsyncadd %s1047, 0
          %s1061 = smul.addr %s49, 8
          %s1062 = scalar_lea.hbm %s11, %s1061
          %s1064 = sshll.u32 %s1050, 4
          %s1065 = int_to_ptr.vmem [resolvable:$true] %s1064
          %s1066 = sshll.u32 %s1062, 4
          %s1067 = int_to_ptr.hbm [resolvable:$true] %s1066
          %1069 = dma.vmem_to_hbm [thread:$0]  %s1065, 128, %s1067, %s1047
        $region108: #{tpu_custom_call.1} parent=63 // pred_fallthru
          _
        // Predicated region
        $region109: #{tpu_custom_call.1} parent=63 // pred_check
          %p1070 = pneg %p374
        $region110: #{tpu_custom_call.1} parent=63 // pred_check_branch
          %1072 = sbr.rel (%p1070) target = $region112
        $region111: #{tpu_custom_call.1} parent=63 // pred_region
          %1074 = vsyncadd %s1052, 0
          %s1075 = smul.addr %s50, 2
          %s1076 = sadd.s32 %s49, %s1075
          %s1077 = smul.addr %s1076, 8
          %s1078 = scalar_lea.hbm %s12, %s1077
          %s1080 = sshll.u32 %s1055, 4
          %s1081 = int_to_ptr.vmem [resolvable:$true] %s1080
          %s1082 = sshll.u32 %s1078, 4
          %s1083 = int_to_ptr.hbm [resolvable:$true] %s1082
          %1085 = dma.vmem_to_hbm [thread:$0]  %s1081, 128, %s1083, %s1052
        $region112: #{tpu_custom_call.1} parent=63 // pred_fallthru
          _
      $region64: #{tpu_custom_call.1} parent=5 // pred_fallthru
        _
      %p1086 = scmp.le.s32.totalorder 2, %s40
      // Predicated region
      $region113: #{tpu_custom_call.1} parent=5 // pred_check
        %p1087 = pneg %p1086
      $region114: #{tpu_custom_call.1} parent=5 // pred_check_branch
        %1089 = sbr.rel (%p1087) target = $region116
      $region115: #{tpu_custom_call.1} parent=5 // pred_region
        %s1090 = ssub.s32 %s40, 2
        // Predicated region
        $region117: #{tpu_custom_call.1} parent=115 // pred_check
          %p1091 = pneg %p352
        $region118: #{tpu_custom_call.1} parent=115 // pred_check_branch
          %1093 = sbr.rel (%p1091) target = $region120
        $region119: #{tpu_custom_call.1} parent=115 // pred_region
          %s1094 = sand.u32 %s337, 1
          %s1095 = scalar_lea.sflag [#allocation5], %s1094
          %s1096 = sand.u32 %s337, 1
          %s1097 = smul.addr %s1096, 8
          %s1098 = scalar_lea.vmem [#allocation17], %s1097
          %1100 = dma.done %s1095, 128
        $region120: #{tpu_custom_call.1} parent=115 // pred_fallthru
          _
        // Predicated region
        $region121: #{tpu_custom_call.1} parent=115 // pred_check
          %p1101 = pneg %p380
        $region122: #{tpu_custom_call.1} parent=115 // pred_check_branch
          %1103 = sbr.rel (%p1101) target = $region124
        $region123: #{tpu_custom_call.1} parent=115 // pred_region
          %s1104 = sand.u32 %s365, 1
          %s1105 = scalar_lea.sflag [#allocation19], %s1104
          %s1106 = sand.u32 %s365, 1
          %s1107 = smul.addr %s1106, 8
          %s1108 = scalar_lea.vmem [#allocation18], %s1107
          %1110 = dma.done %s1105, 128
        $region124: #{tpu_custom_call.1} parent=115 // pred_fallthru
          _
      $region116: #{tpu_custom_call.1} parent=5 // pred_fallthru
        _
    $region6: #{tpu_custom_call.1} parent=1 // loop_footer
      %s44 = sadd.s32 1, %s40
    $region7: #{tpu_custom_call.1} parent=1 // loop_footer_branch
      %39 = sbr.rel target = $region3
    $region8: #{tpu_custom_call.1} parent=1 // loop_exit
      _
    %1111 = vsyncpa [#allocation4], 1
    %s1112 = scalar_lea.sflag [#allocation4], 1
    %1113 = vsyncpa %s1112, 1
    %1114 = vsyncpa [#allocation7], 1
    %s1115 = scalar_lea.sflag [#allocation7], 1
    %1116 = vsyncpa %s1115, 1
    %1117 = vsyncpa [#allocation10], 1
    %s1118 = scalar_lea.sflag [#allocation10], 1
    %1119 = vsyncpa %s1118, 1
    %1120 = vsyncpa [#allocation13], 1
    %s1121 = scalar_lea.sflag [#allocation13], 1
    %1122 = vsyncpa %s1121, 1
    %1123 = vsyncpa [#allocation16], 1
    %s1124 = scalar_lea.sflag [#allocation16], 1
    %1125 = vsyncpa %s1124, 1
    %1126 = vsyncpa [#allocation5], 1
    %s1127 = scalar_lea.sflag [#allocation5], 1
    %1128 = vsyncpa %s1127, 1
    %1129 = vsyncpa [#allocation19], 1
    %s1130 = scalar_lea.sflag [#allocation19], 1
    %1131 = vsyncpa %s1130, 1

</llo_original>
